<compile_context>
chip_gen: v5e
topology: v5e:2x2
jax: 0.10.0
libtpu: 0.0.40
codegen_flags: <defaults>
</compile_context>

<pallas_src>
import jax
import jax.numpy as jnp
from jax.experimental import pallas as pl
from jax.experimental.pallas import tpu as pltpu

EPS = 1e-5
NEG_SLOPE = 0.1
LANE = 128


def _round_up(x, m):
    return (x + m - 1) // m * m


def _vmem_limit_bytes():
    """Per-generation VMEM budget: ~3/4 of physical, capped at 100 MiB."""
    try:
        cap = pltpu.get_tpu_info().vmem_capacity_bytes
    except Exception:
        cap = 64 * 1024 * 1024          # conservative (v7x-sized) fallback
    return int(min(cap * 3 // 4, 100 * 1024 * 1024))


def _make_conv_tile(k, tr, Wo, Cin):
    """Fused-im2col conv tile.

    x_ref: (1, tr+k-1, Wo+k-1, Cin) bf16 slab (halo rows included)
    w_ref: (k*k, Cin, Cp)          bf16 (Cp = Cout padded to 128 lanes)
    Returns the (tr*Wo, Cp) f32 conv accumulator (k*k shifted MXU matmuls).
    """
    def conv_tile(x_ref, w_ref):
        acc = None
        for dy in range(k):
            for dx in range(k):
                lhs = x_ref[0, dy:dy + tr, dx:dx + Wo, :].reshape(tr * Wo, Cin)
                y = jnp.dot(lhs, w_ref[dy * k + dx],
                            preferred_element_type=jnp.float32)
                acc = y if acc is None else acc + y
        return acc
    return conv_tile


def _make_stats_kernel(conv_tile, tr, Wo, Ho, T):
    # Phase 1: conv tile (never stored) -> per-tile [sum, centered sumsq].
    def kernel(x_ref, w_ref, st_ref):
        acc = conv_tile(x_ref, w_ref)                       # (tr*Wo, Cp) f32
        t = pl.program_id(0) % T                            # row-tile index
        valid = jnp.minimum(tr, Ho - t * tr) * Wo           # valid rows in tile
        rows = jax.lax.broadcasted_iota(jnp.int32, (tr * Wo, 1), 0)
        mask = rows < valid
        cnt = valid.astype(jnp.float32)
        s = jnp.sum(jnp.where(mask, acc, 0.0), axis=0, keepdims=True)   # (1,Cp)
        d = jnp.where(mask, acc - s / cnt, 0.0)             # centered (stable)
        ssq = jnp.sum(d * d, axis=0, keepdims=True)
        st_ref[0, 0:1, :] = s
        st_ref[0, 1:2, :] = ssq
    return kernel


def _make_bn_act_kernel(conv_tile, tr, Wo, Cout):
    # Phase 2: recompute conv tile, apply folded BN + LeakyReLU, store unpadded.
    def kernel(x_ref, w_ref, scale_ref, shift_ref, o_ref):
        acc = conv_tile(x_ref, w_ref)                       # (tr*Wo, Cp) f32
        yn = acc * scale_ref[...] + shift_ref[...]
        yn = jnp.where(yn >= 0, yn, NEG_SLOPE * yn)
        o_ref[0] = yn.reshape(tr, Wo, -1)[:, :, :Cout]
    return kernel


def cnn_block_forward(x, conv_w, gamma, beta, *, k=3, pad=1, tile_rows=None):
    """x: (N, Cin, H, W) NCHW.  conv_w: (Cout, Cin, k, k).  Returns NCHW f32."""
    N, Cin, H, W = x.shape
    Cout = conv_w.shape[0]
    Hp, Wp = H + 2 * pad, W + 2 * pad
    Ho, Wo = Hp - k + 1, Wp - k + 1
    Cp = _round_up(Cout, LANE)
    vmem_limit = _vmem_limit_bytes()

    if tile_rows is None:
        # Target ~2k output rows per step; back off to fit double-buffered
        # slab + output tile (+ f32 accumulator) within the VMEM budget.
        tile_rows = max(1, min(Ho, 2048 // max(Wo, 1)))
        while tile_rows > 1 and 2 * (
                (tile_rows + k - 1) * Wp * Cin * 2          # bf16 slab
                + tile_rows * _round_up(Wo, 8) * LANE * 4   # f32 acc / out tile
        ) > vmem_limit // 3:
            tile_rows //= 2
    tr = max(1, min(tile_rows, Ho))
    T = pl.cdiv(Ho, tr)
    Hs = tr + k - 1
    Hext = T * tr + k - 1

    # ---- XLA-side prep (no k^2 im2col expansion; only k-1 halo rows/tile) ---
    xt = jnp.transpose(x, (0, 2, 3, 1))                                  # NHWC
    xp = jnp.pad(xt, ((0, 0), (pad, pad + Hext - Hp), (pad, pad), (0, 0)))
    xp = xp.astype(jnp.bfloat16)
    slabs = jnp.concatenate(
        [xp[:, t * tr:t * tr + Hs][:, None] for t in range(T)], axis=1)
    slabs = slabs.reshape(N * T, Hs, Wp, Cin)                            # bf16

    wmat = jnp.transpose(conv_w, (2, 3, 1, 0)).reshape(k * k, Cin, Cout)
    wmat_p = jnp.zeros((k * k, Cin, Cp), jnp.bfloat16).at[:, :, :Cout].set(
        wmat.astype(jnp.bfloat16))

    conv_tile = _make_conv_tile(k, tr, Wo, Cin)
    cparams = pltpu.CompilerParams(
        dimension_semantics=("parallel",),        # shard tiles across TCs (v7x)
        vmem_limit_bytes=vmem_limit)

    slab_spec = pl.BlockSpec((1, Hs, Wp, Cin), lambda i: (i, 0, 0, 0))
    w_spec = pl.BlockSpec((k * k, Cin, Cp), lambda i: (0, 0, 0))   # resident

    conv_flops = 2 * (N * T) * (tr * Wo) * Cin * Cp * (k * k)
    slab_bytes = slabs.size * 2
    w_bytes = wmat_p.size * 2

    # ---- Phase 1: per-tile channel stats only (no conv output to HBM) -------
    stats = pl.pallas_call(
        _make_stats_kernel(conv_tile, tr, Wo, Ho, T),
        out_shape=jax.ShapeDtypeStruct((N * T, 2, Cp), jnp.float32),
        grid=(N * T,),
        in_specs=[slab_spec, w_spec],
        out_specs=pl.BlockSpec((1, 2, Cp), lambda i: (i, 0, 0)),
        compiler_params=cparams,
        cost_estimate=pl.CostEstimate(
            flops=conv_flops, transcendentals=0,
            bytes_accessed=slab_bytes + w_bytes + (N * T) * 2 * Cp * 4),
    )(slabs, wmat_p)

    # ---- Glue: Chan parallel-variance merge -> BN scale/shift (f32, tiny) ---
    sums, ssqc = stats[:, 0, :], stats[:, 1, :]                    # (N*T, Cp)
    cnt_t = (jnp.minimum(tr, Ho - jnp.arange(T) * tr) * Wo).astype(jnp.float32)
    counts = jnp.tile(cnt_t, N)[:, None]                           # (N*T, 1)
    total = float(N * Ho * Wo)
    mean = jnp.sum(sums, axis=0) / total                           # (Cp,)
    m2 = jnp.sum(ssqc + counts * (sums / counts - mean) ** 2, axis=0)
    var = jnp.maximum(m2 / total, 0.0)                             # biased var
    inv = jax.lax.rsqrt(var + EPS)
    gamma_p = jnp.zeros((Cp,), jnp.float32).at[:Cout].set(gamma.astype(jnp.float32))
    beta_p = jnp.zeros((Cp,), jnp.float32).at[:Cout].set(beta.astype(jnp.float32))
    scale = (gamma_p * inv).reshape(1, Cp)                         # pad lanes -> 0
    shift = (beta_p - mean * gamma_p * inv).reshape(1, Cp)

    # ---- Phase 2: recompute conv with BN folded + LeakyReLU, store unpadded --
    out_blocks = pl.pallas_call(
        _make_bn_act_kernel(conv_tile, tr, Wo, Cout),
        out_shape=jax.ShapeDtypeStruct((N * T, tr, Wo, Cout), jnp.float32),
        grid=(N * T,),
        in_specs=[slab_spec, w_spec,
                  pl.BlockSpec((1, Cp), lambda i: (0, 0)),
                  pl.BlockSpec((1, Cp), lambda i: (0, 0))],
        out_specs=pl.BlockSpec((1, tr, Wo, Cout), lambda i: (i, 0, 0, 0)),
        compiler_params=cparams,
        cost_estimate=pl.CostEstimate(
            flops=conv_flops + 4 * (N * T) * tr * Wo * Cp, transcendentals=0,
            bytes_accessed=slab_bytes + w_bytes + 2 * Cp * 4
                           + (N * T) * tr * Wo * Cout * 4),
    )(slabs, wmat_p, scale, shift)

    out = out_blocks.reshape(N, T * tr, Wo, Cout)[:, :Ho]          # drop pad rows
    return jnp.transpose(out, (0, 3, 1, 2))                        # back to NCHW


def reference_forward(x, conv_w, gamma, beta, *, k=3, pad=1):
    """Pure-JAX f32 reference (same math) for a sanity check."""
    y = jax.lax.conv_general_dilated(
        x, conv_w, window_strides=(1, 1), padding=((pad, pad), (pad, pad)),
        dimension_numbers=("NCHW", "OIHW", "NCHW"))
    mean = jnp.mean(y, axis=(0, 2, 3), keepdims=True)
    var = jnp.mean((y - mean) ** 2, axis=(0, 2, 3), keepdims=True)
    yn = (y - mean) * jax.lax.rsqrt(var + EPS)
    yn = yn * gamma.reshape(1, -1, 1, 1) + beta.reshape(1, -1, 1, 1)
    return jnp.where(yn >= 0, yn, NEG_SLOPE * yn)


if __name__ == "__main__":
    # CNNBlock(in_channel=4, out_channel=8, kernel_size=3, padding=1).
    N, Cin, H, W = 2, 4, 16, 16
    Cout, k, pad = 8, 3, 1

    key = jax.random.PRNGKey(0)
    kx, kw = jax.random.split(key)
    x = jax.random.normal(kx, (N, Cin, H, W), dtype=jnp.float32)
    conv_w = jax.random.normal(kw, (Cout, Cin, k, k), dtype=jnp.float32) * 0.1
    gamma = jnp.ones((Cout,), dtype=jnp.float32)   # BatchNorm2d default init
    beta = jnp.zeros((Cout,), dtype=jnp.float32)

    # tile_rows=6 -> 3 row-tiles per image (grid=6): exercises the fused-im2col
    # halo slabs and the partial-last-tile stats masking.
    out = cnn_block_forward(x, conv_w, gamma, beta, k=k, pad=pad, tile_rows=6)
    out = jax.block_until_ready(out)

    ref = reference_forward(x, conv_w, gamma, beta, k=k, pad=pad)
    assert out.shape == (N, Cout, H, W)
    # Tolerance sized for bf16 MXU operands (f32 accumulation / BN math).
    assert jnp.allclose(out, ref, atol=2e-2, rtol=2e-2), "mismatch vs reference"

    print("KERNEL_OK")
</pallas_src>

<mosaic_0001>
module attributes {stable_mosaic.version = 11 : i64} {
  func.func @kernel(%arg0: i32, %arg1: memref<1x8x18x4xbf16, #tpu.memory_space<vmem>>, %arg2: memref<9x4x128xbf16, #tpu.memory_space<vmem>>, %arg3: memref<1x2x128xf32, #tpu.memory_space<vmem>>) attributes {dimension_semantics = [#tpu.dimension_semantics<parallel>], iteration_bounds = array<i64: 6>, scalar_prefetch = 0 : i64, scratch_operands = 0 : i64, tpu.core_type = #tpu.core_type<tc>, window_params = [{transform_indices = @transform_0, window_bounds = array<i64: 1, 8, 18, 4>}, {pipeline_mode = #tpu.pipeline_mode<synchronous>, transform_indices = @transform_1, window_bounds = array<i64: 9, 4, 128>}, {transform_indices = @transform_2, window_bounds = array<i64: 1, 2, 128>}]} {
    %c0 = arith.constant 0 : index
    %c0_0 = arith.constant 0 : index
    %c0_1 = arith.constant 0 : index
    %c0_2 = arith.constant 0 : index
    %0 = vector.load %arg1[%c0, %c0_0, %c0_1, %c0_2] : memref<1x8x18x4xbf16, #tpu.memory_space<vmem>>, vector<1x6x16x4xbf16>
    %1 = vector.shape_cast %0 : vector<1x6x16x4xbf16> to vector<6x16x4xbf16>
    %2 = vector.shape_cast %1 : vector<6x16x4xbf16> to vector<96x4xbf16>
    %c0_3 = arith.constant 0 : index
    %c0_4 = arith.constant 0 : index
    %c0_5 = arith.constant 0 : index
    %3 = vector.load %arg2[%c0_3, %c0_4, %c0_5] : memref<9x4x128xbf16, #tpu.memory_space<vmem>>, vector<1x4x128xbf16>
    %4 = vector.shape_cast %3 : vector<1x4x128xbf16> to vector<4x128xbf16>
    %cst = arith.constant dense<0.000000e+00> : vector<96x128xf32>
    %5 = tpu.matmul %2, %4, %cst {dimension_numbers = #tpu.dot_dimension_numbers<[1], [0], [0], [1], [0, 0, 1, 1], [], []>} : vector<96x4xbf16>, vector<4x128xbf16>, vector<96x128xf32> -> vector<96x128xf32>
    %c0_6 = arith.constant 0 : index
    %c0_7 = arith.constant 0 : index
    %c1 = arith.constant 1 : index
    %c0_8 = arith.constant 0 : index
    %6 = vector.load %arg1[%c0_6, %c0_7, %c1, %c0_8] : memref<1x8x18x4xbf16, #tpu.memory_space<vmem>>, vector<1x6x16x4xbf16>
    %7 = vector.shape_cast %6 : vector<1x6x16x4xbf16> to vector<6x16x4xbf16>
    %8 = vector.shape_cast %7 : vector<6x16x4xbf16> to vector<96x4xbf16>
    %c1_9 = arith.constant 1 : index
    %c0_10 = arith.constant 0 : index
    %c0_11 = arith.constant 0 : index
    %9 = vector.load %arg2[%c1_9, %c0_10, %c0_11] : memref<9x4x128xbf16, #tpu.memory_space<vmem>>, vector<1x4x128xbf16>
    %10 = vector.shape_cast %9 : vector<1x4x128xbf16> to vector<4x128xbf16>
    %cst_12 = arith.constant dense<0.000000e+00> : vector<96x128xf32>
    %11 = tpu.matmul %8, %10, %cst_12 {dimension_numbers = #tpu.dot_dimension_numbers<[1], [0], [0], [1], [0, 0, 1, 1], [], []>} : vector<96x4xbf16>, vector<4x128xbf16>, vector<96x128xf32> -> vector<96x128xf32>
    %12 = arith.addf %5, %11 : vector<96x128xf32>
    %c0_13 = arith.constant 0 : index
    %c0_14 = arith.constant 0 : index
    %c2 = arith.constant 2 : index
    %c0_15 = arith.constant 0 : index
    %13 = vector.load %arg1[%c0_13, %c0_14, %c2, %c0_15] : memref<1x8x18x4xbf16, #tpu.memory_space<vmem>>, vector<1x6x16x4xbf16>
    %14 = vector.shape_cast %13 : vector<1x6x16x4xbf16> to vector<6x16x4xbf16>
    %15 = vector.shape_cast %14 : vector<6x16x4xbf16> to vector<96x4xbf16>
    %c2_16 = arith.constant 2 : index
    %c0_17 = arith.constant 0 : index
    %c0_18 = arith.constant 0 : index
    %16 = vector.load %arg2[%c2_16, %c0_17, %c0_18] : memref<9x4x128xbf16, #tpu.memory_space<vmem>>, vector<1x4x128xbf16>
    %17 = vector.shape_cast %16 : vector<1x4x128xbf16> to vector<4x128xbf16>
    %cst_19 = arith.constant dense<0.000000e+00> : vector<96x128xf32>
    %18 = tpu.matmul %15, %17, %cst_19 {dimension_numbers = #tpu.dot_dimension_numbers<[1], [0], [0], [1], [0, 0, 1, 1], [], []>} : vector<96x4xbf16>, vector<4x128xbf16>, vector<96x128xf32> -> vector<96x128xf32>
    %19 = arith.addf %12, %18 : vector<96x128xf32>
    %c0_20 = arith.constant 0 : index
    %c1_21 = arith.constant 1 : index
    %c0_22 = arith.constant 0 : index
    %c0_23 = arith.constant 0 : index
    %20 = vector.load %arg1[%c0_20, %c1_21, %c0_22, %c0_23] : memref<1x8x18x4xbf16, #tpu.memory_space<vmem>>, vector<1x6x16x4xbf16>
    %21 = vector.shape_cast %20 : vector<1x6x16x4xbf16> to vector<6x16x4xbf16>
    %22 = vector.shape_cast %21 : vector<6x16x4xbf16> to vector<96x4xbf16>
    %c3 = arith.constant 3 : index
    %c0_24 = arith.constant 0 : index
    %c0_25 = arith.constant 0 : index
    %23 = vector.load %arg2[%c3, %c0_24, %c0_25] : memref<9x4x128xbf16, #tpu.memory_space<vmem>>, vector<1x4x128xbf16>
    %24 = vector.shape_cast %23 : vector<1x4x128xbf16> to vector<4x128xbf16>
    %cst_26 = arith.constant dense<0.000000e+00> : vector<96x128xf32>
    %25 = tpu.matmul %22, %24, %cst_26 {dimension_numbers = #tpu.dot_dimension_numbers<[1], [0], [0], [1], [0, 0, 1, 1], [], []>} : vector<96x4xbf16>, vector<4x128xbf16>, vector<96x128xf32> -> vector<96x128xf32>
    %26 = arith.addf %19, %25 : vector<96x128xf32>
    %c0_27 = arith.constant 0 : index
    %c1_28 = arith.constant 1 : index
    %c1_29 = arith.constant 1 : index
    %c0_30 = arith.constant 0 : index
    %27 = vector.load %arg1[%c0_27, %c1_28, %c1_29, %c0_30] : memref<1x8x18x4xbf16, #tpu.memory_space<vmem>>, vector<1x6x16x4xbf16>
    %28 = vector.shape_cast %27 : vector<1x6x16x4xbf16> to vector<6x16x4xbf16>
    %29 = vector.shape_cast %28 : vector<6x16x4xbf16> to vector<96x4xbf16>
    %c4 = arith.constant 4 : index
    %c0_31 = arith.constant 0 : index
    %c0_32 = arith.constant 0 : index
    %30 = vector.load %arg2[%c4, %c0_31, %c0_32] : memref<9x4x128xbf16, #tpu.memory_space<vmem>>, vector<1x4x128xbf16>
    %31 = vector.shape_cast %30 : vector<1x4x128xbf16> to vector<4x128xbf16>
    %cst_33 = arith.constant dense<0.000000e+00> : vector<96x128xf32>
    %32 = tpu.matmul %29, %31, %cst_33 {dimension_numbers = #tpu.dot_dimension_numbers<[1], [0], [0], [1], [0, 0, 1, 1], [], []>} : vector<96x4xbf16>, vector<4x128xbf16>, vector<96x128xf32> -> vector<96x128xf32>
    %33 = arith.addf %26, %32 : vector<96x128xf32>
    %c0_34 = arith.constant 0 : index
    %c1_35 = arith.constant 1 : index
    %c2_36 = arith.constant 2 : index
    %c0_37 = arith.constant 0 : index
    %34 = vector.load %arg1[%c0_34, %c1_35, %c2_36, %c0_37] : memref<1x8x18x4xbf16, #tpu.memory_space<vmem>>, vector<1x6x16x4xbf16>
    %35 = vector.shape_cast %34 : vector<1x6x16x4xbf16> to vector<6x16x4xbf16>
    %36 = vector.shape_cast %35 : vector<6x16x4xbf16> to vector<96x4xbf16>
    %c5 = arith.constant 5 : index
    %c0_38 = arith.constant 0 : index
    %c0_39 = arith.constant 0 : index
    %37 = vector.load %arg2[%c5, %c0_38, %c0_39] : memref<9x4x128xbf16, #tpu.memory_space<vmem>>, vector<1x4x128xbf16>
    %38 = vector.shape_cast %37 : vector<1x4x128xbf16> to vector<4x128xbf16>
    %cst_40 = arith.constant dense<0.000000e+00> : vector<96x128xf32>
    %39 = tpu.matmul %36, %38, %cst_40 {dimension_numbers = #tpu.dot_dimension_numbers<[1], [0], [0], [1], [0, 0, 1, 1], [], []>} : vector<96x4xbf16>, vector<4x128xbf16>, vector<96x128xf32> -> vector<96x128xf32>
    %40 = arith.addf %33, %39 : vector<96x128xf32>
    %c0_41 = arith.constant 0 : index
    %c2_42 = arith.constant 2 : index
    %c0_43 = arith.constant 0 : index
    %c0_44 = arith.constant 0 : index
    %41 = vector.load %arg1[%c0_41, %c2_42, %c0_43, %c0_44] : memref<1x8x18x4xbf16, #tpu.memory_space<vmem>>, vector<1x6x16x4xbf16>
    %42 = vector.shape_cast %41 : vector<1x6x16x4xbf16> to vector<6x16x4xbf16>
    %43 = vector.shape_cast %42 : vector<6x16x4xbf16> to vector<96x4xbf16>
    %c6 = arith.constant 6 : index
    %c0_45 = arith.constant 0 : index
    %c0_46 = arith.constant 0 : index
    %44 = vector.load %arg2[%c6, %c0_45, %c0_46] : memref<9x4x128xbf16, #tpu.memory_space<vmem>>, vector<1x4x128xbf16>
    %45 = vector.shape_cast %44 : vector<1x4x128xbf16> to vector<4x128xbf16>
    %cst_47 = arith.constant dense<0.000000e+00> : vector<96x128xf32>
    %46 = tpu.matmul %43, %45, %cst_47 {dimension_numbers = #tpu.dot_dimension_numbers<[1], [0], [0], [1], [0, 0, 1, 1], [], []>} : vector<96x4xbf16>, vector<4x128xbf16>, vector<96x128xf32> -> vector<96x128xf32>
    %47 = arith.addf %40, %46 : vector<96x128xf32>
    %c0_48 = arith.constant 0 : index
    %c2_49 = arith.constant 2 : index
    %c1_50 = arith.constant 1 : index
    %c0_51 = arith.constant 0 : index
    %48 = vector.load %arg1[%c0_48, %c2_49, %c1_50, %c0_51] : memref<1x8x18x4xbf16, #tpu.memory_space<vmem>>, vector<1x6x16x4xbf16>
    %49 = vector.shape_cast %48 : vector<1x6x16x4xbf16> to vector<6x16x4xbf16>
    %50 = vector.shape_cast %49 : vector<6x16x4xbf16> to vector<96x4xbf16>
    %c7 = arith.constant 7 : index
    %c0_52 = arith.constant 0 : index
    %c0_53 = arith.constant 0 : index
    %51 = vector.load %arg2[%c7, %c0_52, %c0_53] : memref<9x4x128xbf16, #tpu.memory_space<vmem>>, vector<1x4x128xbf16>
    %52 = vector.shape_cast %51 : vector<1x4x128xbf16> to vector<4x128xbf16>
    %cst_54 = arith.constant dense<0.000000e+00> : vector<96x128xf32>
    %53 = tpu.matmul %50, %52, %cst_54 {dimension_numbers = #tpu.dot_dimension_numbers<[1], [0], [0], [1], [0, 0, 1, 1], [], []>} : vector<96x4xbf16>, vector<4x128xbf16>, vector<96x128xf32> -> vector<96x128xf32>
    %54 = arith.addf %47, %53 : vector<96x128xf32>
    %c0_55 = arith.constant 0 : index
    %c2_56 = arith.constant 2 : index
    %c2_57 = arith.constant 2 : index
    %c0_58 = arith.constant 0 : index
    %55 = vector.load %arg1[%c0_55, %c2_56, %c2_57, %c0_58] : memref<1x8x18x4xbf16, #tpu.memory_space<vmem>>, vector<1x6x16x4xbf16>
    %56 = vector.shape_cast %55 : vector<1x6x16x4xbf16> to vector<6x16x4xbf16>
    %57 = vector.shape_cast %56 : vector<6x16x4xbf16> to vector<96x4xbf16>
    %c8 = arith.constant 8 : index
    %c0_59 = arith.constant 0 : index
    %c0_60 = arith.constant 0 : index
    %58 = vector.load %arg2[%c8, %c0_59, %c0_60] : memref<9x4x128xbf16, #tpu.memory_space<vmem>>, vector<1x4x128xbf16>
    %59 = vector.shape_cast %58 : vector<1x4x128xbf16> to vector<4x128xbf16>
    %cst_61 = arith.constant dense<0.000000e+00> : vector<96x128xf32>
    %60 = tpu.matmul %57, %59, %cst_61 {dimension_numbers = #tpu.dot_dimension_numbers<[1], [0], [0], [1], [0, 0, 1, 1], [], []>} : vector<96x4xbf16>, vector<4x128xbf16>, vector<96x128xf32> -> vector<96x128xf32>
    %61 = arith.addf %54, %60 : vector<96x128xf32>
    %c3_i32 = arith.constant 3 : i32
    %c0_i32 = arith.constant 0 : i32
    %62 = arith.cmpi eq, %c3_i32, %c0_i32 : i32
    %c1_i32 = arith.constant 1 : i32
    %63 = arith.select %62, %c1_i32, %c3_i32 : i32
    %64 = arith.remsi %arg0, %63 : i32
    %c0_i32_62 = arith.constant 0 : i32
    %65 = arith.cmpi ne, %64, %c0_i32_62 : i32
    %c0_i32_63 = arith.constant 0 : i32
    %66 = arith.cmpi slt, %64, %c0_i32_63 : i32
    %c0_i32_64 = arith.constant 0 : i32
    %67 = arith.cmpi slt, %63, %c0_i32_64 : i32
    %68 = arith.xori %66, %67 : i1
    %69 = arith.andi %68, %65 : i1
    %70 = arith.addi %64, %63 : i32
    %71 = arith.select %69, %70, %64 : i32
    %c6_i32 = arith.constant 6 : i32
    %72 = arith.muli %71, %c6_i32 : i32
    %c16_i32 = arith.constant 16 : i32
    %73 = arith.subi %c16_i32, %72 : i32
    %c6_i32_65 = arith.constant 6 : i32
    %74 = arith.minsi %c6_i32_65, %73 : i32
    %c16_i32_66 = arith.constant 16 : i32
    %75 = arith.muli %74, %c16_i32_66 : i32
    %76 = tpu.iota {dimensions = array<i32: 0>} : vector<96x1xi32>
    %77 = vector.broadcast %75 : i32 to vector<96x1xi32>
    %78 = arith.cmpi slt, %76, %77 : vector<96x1xi32>
    %79 = arith.sitofp %75 : i32 to f32
    %cst_67 = arith.constant 0.000000e+00 : f32
    %80 = vector.shape_cast %78 : vector<96x1xi1> to vector<96x1xi1>
    %81 = vector.broadcast %80 : vector<96x1xi1> to vector<96x128xi1>
    %82 = vector.broadcast %cst_67 : f32 to vector<96x128xf32>
    %83 = arith.select %81, %61, %82 : vector<96x128xi1>, vector<96x128xf32>
    %cst_68 = arith.constant dense<0.000000e+00> : vector<128xf32>
    %84 = vector.multi_reduction <add>, %83, %cst_68 [0] : vector<96x128xf32> to vector<128xf32>
    %85 = vector.shape_cast %84 : vector<128xf32> to vector<1x128xf32>
    %86 = vector.broadcast %79 : f32 to vector<1x128xf32>
    %87 = arith.divf %85, %86 : vector<1x128xf32>
    %88 = vector.broadcast %87 : vector<1x128xf32> to vector<96x128xf32>
    %89 = arith.subf %61, %88 : vector<96x128xf32>
    %cst_69 = arith.constant 0.000000e+00 : f32
    %90 = vector.shape_cast %78 : vector<96x1xi1> to vector<96x1xi1>
    %91 = vector.broadcast %90 : vector<96x1xi1> to vector<96x128xi1>
    %92 = vector.broadcast %cst_69 : f32 to vector<96x128xf32>
    %93 = arith.select %91, %89, %92 : vector<96x128xi1>, vector<96x128xf32>
    %94 = arith.mulf %93, %93 : vector<96x128xf32>
    %cst_70 = arith.constant dense<0.000000e+00> : vector<128xf32>
    %95 = vector.multi_reduction <add>, %94, %cst_70 [0] : vector<96x128xf32> to vector<128xf32>
    %96 = vector.shape_cast %95 : vector<128xf32> to vector<1x128xf32>
    %c0_71 = arith.constant 0 : index
    %c0_72 = arith.constant 0 : index
    %c0_73 = arith.constant 0 : index
    %97 = vector.load %arg3[%c0_71, %c0_72, %c0_73] : memref<1x2x128xf32, #tpu.memory_space<vmem>>, vector<1x1x128xf32>
    %98 = vector.shape_cast %97 : vector<1x1x128xf32> to vector<1x128xf32>
    %99 = vector.shape_cast %85 : vector<1x128xf32> to vector<1x1x128xf32>
    tpu.vector_store %arg3[%c0_71, %c0_72, %c0_73], %99 {strides = array<i32>} : memref<1x2x128xf32, #tpu.memory_space<vmem>>, vector<1x1x128xf32>,
    %c0_74 = arith.constant 0 : index
    %c1_75 = arith.constant 1 : index
    %c0_76 = arith.constant 0 : index
    %100 = vector.load %arg3[%c0_74, %c1_75, %c0_76] : memref<1x2x128xf32, #tpu.memory_space<vmem>>, vector<1x1x128xf32>
    %101 = vector.shape_cast %100 : vector<1x1x128xf32> to vector<1x128xf32>
    %102 = vector.shape_cast %96 : vector<1x128xf32> to vector<1x1x128xf32>
    tpu.vector_store %arg3[%c0_74, %c1_75, %c0_76], %102 {strides = array<i32>} : memref<1x2x128xf32, #tpu.memory_space<vmem>>, vector<1x1x128xf32>,
    return
  }
  func.func @transform_0(%arg0: i32) -> (i32, i32, i32, i32) {
    %c0_i32 = arith.constant 0 : i32
    %c0_i32_0 = arith.constant 0 : i32
    %c0_i32_1 = arith.constant 0 : i32
    %c0_i32_2 = arith.constant 0 : i32
    return %arg0, %c0_i32, %c0_i32_0, %c0_i32_1 : i32, i32, i32, i32
  }
  func.func @transform_1(%arg0: i32) -> (i32, i32, i32) {
    %c0_i32 = arith.constant 0 : i32
    %c0_i32_0 = arith.constant 0 : i32
    %c0_i32_1 = arith.constant 0 : i32
    %c0_i32_2 = arith.constant 0 : i32
    return %c0_i32, %c0_i32_0, %c0_i32_1 : i32, i32, i32
  }
  func.func @transform_2(%arg0: i32) -> (i32, i32, i32) {
    %c0_i32 = arith.constant 0 : i32
    %c0_i32_0 = arith.constant 0 : i32
    %c0_i32_1 = arith.constant 0 : i32
    return %arg0, %c0_i32, %c0_i32_0 : i32, i32, i32
  }
}

</mosaic_0001>

<llo_original>
// kernel: tpu_custom_call.1
$region0: #{tpu_custom_call.1}
  #allocation0 [shape = 'u32[]', space=smem, size = 0x4, offset = 0x4, fixed_abs, tag = 'smem constant byte address 0x4 - core index']
  #allocation1 [shape = 'u32[72,128]{1,0:T(1,128)}', space=vmem, size = 0x9000, scoped, tag = 'internal scratch']
  %s0 = inlined_call_operand.vmem [shape: bf16[6,8,18,4], index: 0, kind: input, shape index: {}]
  %s1 = inlined_call_operand.vmem [shape: bf16[9,4,128], index: 1, kind: input, shape index: {}]
  %s2 = inlined_call_operand.hbm [shape: f32[6,2,128], index: 2, kind: output, shape index: {}]
  %s3 = sld [smem:[#allocation0]]
  $region41: #{tpu_custom_call.1} parent=0
    _
  %s5 = ssub.s32 1, %s3
  %s6 = scalar_select 0, %s5, %s3
  $region1: #{tpu_custom_call.1} parent=0
    #allocation2 [shape = 'u8[2048]{0}', space=vmem, size = 0x800, scoped, tag = 'output window, operand 0']
    #allocation3 [shape = 's32[2]{0}', space=sflag, size = 0x8, scoped, tag = 'scoped memory for tpu_custom_call.1']
    %7 = vsyncpa [#allocation3], 0
    %s8 = scalar_lea.sflag [#allocation3], 1
    %9 = vsyncpa %s8, 0
    loop: start=0, step=1, limit=8
    $region2: #{tpu_custom_call.1} parent=1 // loop_pre_header
      _
    $region3: #{tpu_custom_call.1} parent=1 // loop_header
      %s11 = sphi 0, %s15
      %p12 = scmp.ge.s32.totalorder %s11, 8
      %s21 = sphi 0, %s23
      %s24 = sphi 0, %s21
      %s25 = sphi 0, %s24
      %s41 = sphi 0, %s25
      %s45 = sphi 0, %s45
      %s47 = sphi 0, %s45
      %s48 = sphi 0, %s47
      %s62 = sphi 0, %s48
      %s68 = sphi 0, %s70
      %s71 = sphi 0, %s68
      %s72 = sphi 0, %s71
      %s88 = sphi 0, %s72
    $region4: #{tpu_custom_call.1} parent=1 // loop_header_branch
      %14 = sbr.rel (%p12) target = $region8
    $region5: #{tpu_custom_call.1} parent=1 // loop_body
      %s16 = ssub.s32 %s11, 1
      %s17 = ssub.s32 %s11, 2
      %s18 = sadd.s32 %s11, 1
      %s19 = ssub.s32 %s11, %s18
      %p20 = scmp.eq.s32.totalorder %s19, 0
      %s22 = sadd.s32 %s21, 1
      %s23 = scalar_select %p20, %s21, %s22
      %p26 = pneg %p20
      %p27 = scmp.eq.s32.totalorder %s11, 5
      %p28 = por %p26, %p27
      %p29 = scmp.ne.s32.totalorder %s21, %s24
      %p30 = scmp.eq.s32.totalorder %s11, 0
      %p31 = por %p29, %p30
      %p32 = scmp.ne.s32.totalorder %s21, %s24
      %p33 = scmp.eq.s32.totalorder %s16, 5
      %p34 = por %p32, %p33
      %p35 = scmp.ne.s32.totalorder %s24, %s25
      %p36 = scmp.eq.s32.totalorder %s16, 0
      %p37 = por %p35, %p36
      %p38 = scmp.ne.s32.totalorder %s24, %s25
      %p39 = scmp.eq.s32.totalorder %s17, 5
      %p40 = por %p38, %p39
      %p42 = scmp.ne.s32.totalorder %s25, %s41
      %p43 = scmp.eq.s32.totalorder %s17, 0
      %p44 = por %p42, %p43
      %s46 = sadd.s32 %s45, 1
      %p49 = scmp.eq.s32.totalorder %s11, 5
      %p50 = scmp.ne.s32.totalorder %s45, %s47
      %p51 = scmp.eq.s32.totalorder %s11, 0
      %p52 = por %p50, %p51
      %p53 = scmp.ne.s32.totalorder %s45, %s47
      %p54 = scmp.eq.s32.totalorder %s16, 5
      %p55 = por %p53, %p54
      %p56 = scmp.ne.s32.totalorder %s47, %s48
      %p57 = scmp.eq.s32.totalorder %s16, 0
      %p58 = por %p56, %p57
      %p59 = scmp.ne.s32.totalorder %s47, %s48
      %p60 = scmp.eq.s32.totalorder %s17, 5
      %p61 = por %p59, %p60
      %p63 = scmp.ne.s32.totalorder %s48, %s62
      %p64 = scmp.eq.s32.totalorder %s17, 0
      %p65 = por %p63, %p64
      %s66 = ssub.s32 %s11, %s18
      %p67 = scmp.eq.s32.totalorder %s66, 0
      %s69 = sadd.s32 %s68, 1
      %s70 = scalar_select %p67, %s68, %s69
      %p73 = pneg %p67
      %p74 = scmp.eq.s32.totalorder %s11, 5
      %p75 = por %p73, %p74
      %p76 = scmp.ne.s32.totalorder %s68, %s71
      %p77 = scmp.eq.s32.totalorder %s11, 0
      %p78 = por %p76, %p77
      %p79 = scmp.ne.s32.totalorder %s68, %s71
      %p80 = scmp.eq.s32.totalorder %s16, 5
      %p81 = por %p79, %p80
      %p82 = scmp.ne.s32.totalorder %s71, %s72
      %p83 = scmp.eq.s32.totalorder %s16, 0
      %p84 = por %p82, %p83
      %p85 = scmp.ne.s32.totalorder %s71, %s72
      %p86 = scmp.eq.s32.totalorder %s17, 5
      %p87 = por %p85, %p86
      %p89 = scmp.ne.s32.totalorder %s72, %s88
      %p90 = scmp.eq.s32.totalorder %s17, 0
      %p91 = por %p89, %p90
      %p92 = scmp.le.s32.totalorder 1, %s11
      %p93 = scmp.lt.s32.totalorder %s11, 7
      %p94 = pnand %p92, %p93
      %p95 = pneg %p94
      // Predicated region
      $region9: #{tpu_custom_call.1} parent=5 // pred_check
        _
      $region10: #{tpu_custom_call.1} parent=5 // pred_check_branch
        %97 = sbr.rel (%p94) target = $region12
      $region11: #{tpu_custom_call.1} parent=5 // pred_region
        %s98 = ssub.s32 %s11, 1
        // Predicated region
        $region13: #{tpu_custom_call.1} parent=11 // pred_check
          %p99 = pneg %p58
        $region14: #{tpu_custom_call.1} parent=11 // pred_check_branch
          %101 = sbr.rel (%p99) target = $region16
        $region15: #{tpu_custom_call.1} parent=11 // pred_region
          _
        $region16: #{tpu_custom_call.1} parent=11 // pred_fallthru
          _
      $region12: #{tpu_custom_call.1} parent=5 // pred_fallthru
        _
      %p102 = scmp.lt.s32.totalorder %s11, 6
      // Predicated region
      $region17: #{tpu_custom_call.1} parent=5 // pred_check
        %p103 = pneg %p102
      $region18: #{tpu_custom_call.1} parent=5 // pred_check_branch
        %105 = sbr.rel (%p103) target = $region20
      $region19: #{tpu_custom_call.1} parent=5 // pred_region
        // Predicated region
        $region21: #{tpu_custom_call.1} parent=19 // pred_check
          %p106 = pneg %p31
        $region22: #{tpu_custom_call.1} parent=19 // pred_check_branch
          %108 = sbr.rel (%p106) target = $region24
        $region23: #{tpu_custom_call.1} parent=19 // pred_region
          %p109 = scmp.lt.s32.totalorder %s11, 5
          %s110 = scalar_select %p109, %s11, 5
          %s111 = smul.addr %s110, 24
          %s112 = smul.addr %s111, 4
          %s113 = scalar_lea.vmem %s0, %s112
        $region24: #{tpu_custom_call.1} parent=19 // pred_fallthru
          _
      $region20: #{tpu_custom_call.1} parent=5 // pred_fallthru
        _
      %p114 = scmp.le.s32.totalorder 1, %s11
      %p115 = scmp.lt.s32.totalorder %s11, 7
      %p116 = pnand %p114, %p115
      %p117 = pneg %p116
      // Predicated region
      $region25: #{tpu_custom_call.1} parent=5 // pred_check
        _
      $region26: #{tpu_custom_call.1} parent=5 // pred_check_branch
        %119 = sbr.rel (%p116) target = $region28
      $region27: #{tpu_custom_call.1} parent=5 // pred_region
        %s120 = ssub.s32 %s11, 1
        %p121 = scmp.lt.s32.totalorder %s16, 5
        %s122 = scalar_select %p121, %s16, 5
        %s123 = smul.addr %s122, 24
        %s124 = smul.addr %s123, 4
        %s125 = scalar_lea.vmem %s0, %s124
        %p126 = pneg %p37
        %p127 = pneg %p34
        %p128 = pneg %p58
        %p129 = pneg %p55
        %p130 = pneg %p84
        %p131 = pneg %p81
        %s132 = sand.u32 %s71, 1
        %s133 = scalar_lea.sflag [#allocation3], %s132
        %s134 = sand.u32 %s71, 1
        %s135 = smul.addr %s134, 2
        %s136 = scalar_lea.vmem [#allocation2], %s135
        %p137 = scmp.lt.s32.totalorder %s16, 5
        %s138 = scalar_select %p137, %s16, 5
        %s139 = smul.addr %s138, 24
        %s140 = smul.addr %s139, 4
        %s141 = scalar_lea.vmem %s0, %s140
        %v143 = vld [vmem:[%s141] sm:$0xf]
        %v144 = vld [vmem:[%s141 + $0x4] sm:$0xf]
        %v145 = vld [vmem:[%s141 + $0xc] sm:$0xf]
        %v146 = vld [vmem:[%s141 + $0x10] sm:$0xf]
        %v147 = vld [vmem:[%s141 + $0x18] sm:$0xf]
        %v148 = vld [vmem:[%s141 + $0x1c] sm:$0xf]
        %v149 = vld [vmem:[%s141 + $0x24] sm:$0xf]
        %v150 = vld [vmem:[%s141 + $0x28] sm:$0xf]
        %v151 = vld [vmem:[%s141 + $0x30] sm:$0xf]
        %v152 = vld [vmem:[%s141 + $0x34] sm:$0xf]
        %v153 = vld [vmem:[%s141 + $0x3c] sm:$0xf]
        %v154 = vld [vmem:[%s141 + $0x40] sm:$0xf]
        %v155 = vld [vmem:[%s1] sm:$0x3]
        %v156 = vld [vmem:[%s141 + $0x8] sm:$0x1]
        %v157 = vld [vmem:[%s141 + $0x14] sm:$0x1]
        %v158 = vld [vmem:[%s141 + $0x20] sm:$0x1]
        %v159 = vld [vmem:[%s141 + $0x2c] sm:$0x1]
        %v160 = vld [vmem:[%s141 + $0x38] sm:$0x1]
        %v161 = vld [vmem:[%s141 + $0x44] sm:$0x1]
        %vm162 = vsmask.f32 3328
        %vm163 = vsmask.f32 7440
        %vm164 = vmor %vm162, %vm163
        %v166 = vshrl.u32 %v143, 16
        %v168 = vrot.slane %v166, 4
        %v169 = vshll.u32 %v143, 16
        %v171 = vrot.slane %v169, 5
        %v172 = vor.u32 %v168, %v171
        %v173 = vrot.slane %v172, 4
        %v175 = vshll.u32 %v144, 16
        %v177 = vrot.slane %v175, 5
        %v178 = vsel %vm164, %v173, %v177
        %v179 = vshrl.u32 %v144, 16
        %v181 = vrot.slane %v179, 4
        %v182 = vor.u32 %v181, %v177
        %v183 = vrot.slane %v182, 4
        %v185 = vshll.u32 %v156, 16
        %v187 = vrot.slane %v185, 5
        %v188 = vsel %vm164, %v183, %v187
        %v190 = vshrl.u32 %v145, 16
        %v192 = vrot.slane %v190, 4
        %v193 = vshll.u32 %v145, 16
        %v195 = vrot.slane %v193, 5
        %v196 = vor.u32 %v192, %v195
        %v197 = vrot.slane %v196, 4
        %v199 = vshll.u32 %v146, 16
        %v201 = vrot.slane %v199, 5
        %v202 = vsel %vm164, %v197, %v201
        %v203 = vshrl.u32 %v146, 16
        %v205 = vrot.slane %v203, 4
        %v206 = vor.u32 %v205, %v201
        %v207 = vrot.slane %v206, 4
        %v209 = vshll.u32 %v157, 16
        %v211 = vrot.slane %v209, 5
        %v212 = vsel %vm164, %v207, %v211
        %v214 = vshrl.u32 %v147, 16
        %v216 = vrot.slane %v214, 4
        %v217 = vshll.u32 %v147, 16
        %v219 = vrot.slane %v217, 5
        %v220 = vor.u32 %v216, %v219
        %v221 = vrot.slane %v220, 4
        %v223 = vshll.u32 %v148, 16
        %v225 = vrot.slane %v223, 5
        %v226 = vsel %vm164, %v221, %v225
        %v227 = vshrl.u32 %v148, 16
        %v229 = vrot.slane %v227, 4
        %v230 = vor.u32 %v229, %v225
        %v231 = vrot.slane %v230, 4
        %v233 = vshll.u32 %v158, 16
        %v235 = vrot.slane %v233, 5
        %v236 = vsel %vm164, %v231, %v235
        %v238 = vshrl.u32 %v149, 16
        %v240 = vrot.slane %v238, 4
        %v241 = vshll.u32 %v149, 16
        %v243 = vrot.slane %v241, 5
        %v244 = vor.u32 %v240, %v243
        %v245 = vrot.slane %v244, 4
        %v247 = vshll.u32 %v150, 16
        %v249 = vrot.slane %v247, 5
        %v250 = vsel %vm164, %v245, %v249
        %v251 = vshrl.u32 %v150, 16
        %v253 = vrot.slane %v251, 4
        %v254 = vor.u32 %v253, %v249
        %v255 = vrot.slane %v254, 4
        %v257 = vshll.u32 %v159, 16
        %v259 = vrot.slane %v257, 5
        %v260 = vsel %vm164, %v255, %v259
        %v262 = vshrl.u32 %v151, 16
        %v264 = vrot.slane %v262, 4
        %v265 = vshll.u32 %v151, 16
        %v267 = vrot.slane %v265, 5
        %v268 = vor.u32 %v264, %v267
        %v269 = vrot.slane %v268, 4
        %v271 = vshll.u32 %v152, 16
        %v273 = vrot.slane %v271, 5
        %v274 = vsel %vm164, %v269, %v273
        %v275 = vshrl.u32 %v152, 16
        %v277 = vrot.slane %v275, 4
        %v278 = vor.u32 %v277, %v273
        %v279 = vrot.slane %v278, 4
        %v281 = vshll.u32 %v160, 16
        %v283 = vrot.slane %v281, 5
        %v284 = vsel %vm164, %v279, %v283
        %v286 = vshrl.u32 %v153, 16
        %v288 = vrot.slane %v286, 4
        %v289 = vshll.u32 %v153, 16
        %v291 = vrot.slane %v289, 5
        %v292 = vor.u32 %v288, %v291
        %v293 = vrot.slane %v292, 4
        %v295 = vshll.u32 %v154, 16
        %v297 = vrot.slane %v295, 5
        %v298 = vsel %vm164, %v293, %v297
        %v299 = vshrl.u32 %v154, 16
        %v301 = vrot.slane %v299, 4
        %v302 = vor.u32 %v301, %v297
        %v303 = vrot.slane %v302, 4
        %v305 = vshll.u32 %v161, 16
        %v307 = vrot.slane %v305, 5
        %v308 = vsel %vm164, %v303, %v307
        %s309 = scalar_lea.vmem %s1, 2
        %v310 = vld [vmem:[%s309] sm:$0x3]
        %v311 = vunpack.c.l.b16 %v178
        %v312 = vunpack.c.l.b16 %v188
        %v313 = vunpack.c.l.b16 %v202
        %v314 = vunpack.c.l.b16 %v212
        %v315 = vunpack.c.l.b16 %v226
        %v316 = vunpack.c.l.b16 %v236
        %v317 = vunpack.c.l.b16 %v250
        %v318 = vunpack.c.l.b16 %v260
        %v319 = vunpack.c.l.b16 %v274
        %v320 = vunpack.c.l.b16 %v284
        %v321 = vunpack.c.l.b16 %v298
        %v322 = vunpack.c.l.b16 %v308
        %v323 = vpack.c.b16 %v312, %v311
        %v324 = vpack.c.b16 %v314, %v313
        %v325 = vpack.c.b16 %v316, %v315
        %v326 = vpack.c.b16 %v318, %v317
        %v327 = vpack.c.b16 %v320, %v319
        %v328 = vpack.c.b16 %v322, %v321
        %vm329 = vcmask 31744
        %v331 = vsel %vm329, %v323, 0
        %v334 = vsel %vm329, %v324, 0
        %v337 = vsel %vm329, %v325, 0
        %v340 = vsel %vm329, %v326, 0
        %v343 = vsel %vm329, %v327, 0
        %v346 = vsel %vm329, %v328, 0
        %vm348 = vcmask 1041408
        %v350 = vsel %vm348, %v310, 0
        %352 = vmatpush.bf16.msra.mxu0 0
        %353 = vmatpush.bf16.msra.mxu0 0
        %354 = vmatpush.bf16.msra.mxu0 0
        %355 = vmatpush.bf16.msra.mxu0 0
        %356 = vmatpush.bf16.msra.mxu0 0
        %357 = vmatpush.bf16.msra.mxu0 0
        %358 = vmatpush.bf16.msra.mxu0 0
        %359 = vmatpush.bf16.msra.mxu0 %v350
        %360 = vmatmul.bf16.gmra.mxu0 %v331
        %v361 = vpop.f32.mrf.mxu0
        %v362 = vadd.f32 0.0, %v361
        %v363 = vpop.f32.mrf.mxu0
        %v364 = vadd.f32 0.0, %v363
        %365 = vmatmul.bf16.gmra.mxu0 %v334
        %v366 = vpop.f32.mrf.mxu0
        %v367 = vadd.f32 0.0, %v366
        %v368 = vpop.f32.mrf.mxu0
        %v369 = vadd.f32 0.0, %v368
        %370 = vmatmul.bf16.gmra.mxu0 %v337
        %v371 = vpop.f32.mrf.mxu0
        %v372 = vadd.f32 0.0, %v371
        %v373 = vpop.f32.mrf.mxu0
        %v374 = vadd.f32 0.0, %v373
        %375 = vmatmul.bf16.gmra.mxu0 %v340
        %v376 = vpop.f32.mrf.mxu0
        %v377 = vadd.f32 0.0, %v376
        %v378 = vpop.f32.mrf.mxu0
        %v379 = vadd.f32 0.0, %v378
        %380 = vmatmul.bf16.gmra.mxu0 %v343
        %v381 = vpop.f32.mrf.mxu0
        %v382 = vadd.f32 0.0, %v381
        %v383 = vpop.f32.mrf.mxu0
        %v384 = vadd.f32 0.0, %v383
        %385 = vmatmul.bf16.gmra.mxu0 %v346
        %v386 = vpop.f32.mrf.mxu0
        %v387 = vadd.f32 0.0, %v386
        %v388 = vpop.f32.mrf.mxu0
        %v389 = vadd.f32 0.0, %v388
        %390 = vdwg.mxu0
        %v403 = vunpack.c.l.b16 %v143
        %v404 = vunpack.c.l.b16 %v144
        %v405 = vunpack.c.l.b16 %v145
        %v406 = vunpack.c.l.b16 %v146
        %v407 = vunpack.c.l.b16 %v147
        %v408 = vunpack.c.l.b16 %v148
        %v409 = vunpack.c.l.b16 %v149
        %v410 = vunpack.c.l.b16 %v150
        %v411 = vunpack.c.l.b16 %v151
        %v412 = vunpack.c.l.b16 %v152
        %v413 = vunpack.c.l.b16 %v153
        %v414 = vunpack.c.l.b16 %v154
        %v415 = vpack.c.b16 %v404, %v403
        %v416 = vpack.c.b16 %v406, %v405
        %v417 = vpack.c.b16 %v408, %v407
        %v418 = vpack.c.b16 %v410, %v409
        %v419 = vpack.c.b16 %v412, %v411
        %v420 = vpack.c.b16 %v414, %v413
        %v422 = vsel %vm329, %v415, 0
        %v425 = vsel %vm329, %v416, 0
        %v428 = vsel %vm329, %v417, 0
        %v431 = vsel %vm329, %v418, 0
        %v434 = vsel %vm329, %v419, 0
        %v437 = vsel %vm329, %v420, 0
        %v440 = vsel %vm348, %v155, 0
        %442 = vmatpush.bf16.msra.mxu0 0
        %443 = vmatpush.bf16.msra.mxu0 0
        %444 = vmatpush.bf16.msra.mxu0 0
        %445 = vmatpush.bf16.msra.mxu0 0
        %446 = vmatpush.bf16.msra.mxu0 0
        %447 = vmatpush.bf16.msra.mxu0 0
        %448 = vmatpush.bf16.msra.mxu0 0
        %449 = vmatpush.bf16.msra.mxu0 %v440
        %450 = vmatmul.bf16.gmra.mxu0 %v422
        %v451 = vpop.f32.mrf.mxu0
        %v452 = vadd.f32 %v362, %v451
        %v453 = vpop.f32.mrf.mxu0
        %v454 = vadd.f32 %v364, %v453
        %455 = vmatmul.bf16.gmra.mxu0 %v425
        %v456 = vpop.f32.mrf.mxu0
        %v457 = vadd.f32 %v367, %v456
        %v458 = vpop.f32.mrf.mxu0
        %v459 = vadd.f32 %v369, %v458
        %460 = vmatmul.bf16.gmra.mxu0 %v428
        %v461 = vpop.f32.mrf.mxu0
        %v462 = vadd.f32 %v372, %v461
        %v463 = vpop.f32.mrf.mxu0
        %v464 = vadd.f32 %v374, %v463
        %465 = vmatmul.bf16.gmra.mxu0 %v431
        %v466 = vpop.f32.mrf.mxu0
        %v467 = vadd.f32 %v377, %v466
        %v468 = vpop.f32.mrf.mxu0
        %v469 = vadd.f32 %v379, %v468
        %470 = vmatmul.bf16.gmra.mxu0 %v434
        %v471 = vpop.f32.mrf.mxu0
        %v472 = vadd.f32 %v382, %v471
        %v473 = vpop.f32.mrf.mxu0
        %v474 = vadd.f32 %v384, %v473
        %475 = vmatmul.bf16.gmra.mxu0 %v437
        %v476 = vpop.f32.mrf.mxu0
        %v477 = vadd.f32 %v387, %v476
        %v478 = vpop.f32.mrf.mxu0
        %v479 = vadd.f32 %v389, %v478
        %480 = vdwg.mxu0
        %v481 = vld [vmem:[%s141] sm:$0xe]
        %v482 = vld [vmem:[%s141 + $0xc] sm:$0xe]
        %v483 = vld [vmem:[%s141 + $0x18] sm:$0xe]
        %v484 = vld [vmem:[%s141 + $0x24] sm:$0xe]
        %v485 = vld [vmem:[%s141 + $0x30] sm:$0xe]
        %v486 = vld [vmem:[%s141 + $0x3c] sm:$0xe]
        %vm499 = vcmask 1042432
        %vm500 = vcmask 1046532
        %vm501 = vmor %vm499, %vm500
        %v502 = vrot.slane %v481, 5
        %v503 = vrot.slane %v502, 4
        %v504 = vrot.slane %v144, 5
        %v505 = vsel %vm501, %v503, %v504
        %v506 = vrot.slane %v504, 4
        %v507 = vrot.slane %v156, 5
        %v508 = vsel %vm501, %v506, %v507
        %v509 = vrot.slane %v482, 5
        %v510 = vrot.slane %v509, 4
        %v511 = vrot.slane %v146, 5
        %v512 = vsel %vm501, %v510, %v511
        %v513 = vrot.slane %v511, 4
        %v514 = vrot.slane %v157, 5
        %v515 = vsel %vm501, %v513, %v514
        %v516 = vrot.slane %v483, 5
        %v517 = vrot.slane %v516, 4
        %v518 = vrot.slane %v148, 5
        %v519 = vsel %vm501, %v517, %v518
        %v520 = vrot.slane %v518, 4
        %v521 = vrot.slane %v158, 5
        %v522 = vsel %vm501, %v520, %v521
        %v523 = vrot.slane %v484, 5
        %v524 = vrot.slane %v523, 4
        %v525 = vrot.slane %v150, 5
        %v526 = vsel %vm501, %v524, %v525
        %v527 = vrot.slane %v525, 4
        %v528 = vrot.slane %v159, 5
        %v529 = vsel %vm501, %v527, %v528
        %v530 = vrot.slane %v485, 5
        %v531 = vrot.slane %v530, 4
        %v532 = vrot.slane %v152, 5
        %v533 = vsel %vm501, %v531, %v532
        %v534 = vrot.slane %v532, 4
        %v535 = vrot.slane %v160, 5
        %v536 = vsel %vm501, %v534, %v535
        %v537 = vrot.slane %v486, 5
        %v538 = vrot.slane %v537, 4
        %v539 = vrot.slane %v154, 5
        %v540 = vsel %vm501, %v538, %v539
        %v541 = vrot.slane %v539, 4
        %v542 = vrot.slane %v161, 5
        %v543 = vsel %vm501, %v541, %v542
        %s544 = scalar_lea.vmem %s1, 4
        %v545 = vld [vmem:[%s544] sm:$0x3]
        %v546 = vunpack.c.l.b16 %v505
        %v547 = vunpack.c.l.b16 %v508
        %v548 = vunpack.c.l.b16 %v512
        %v549 = vunpack.c.l.b16 %v515
        %v550 = vunpack.c.l.b16 %v519
        %v551 = vunpack.c.l.b16 %v522
        %v552 = vunpack.c.l.b16 %v526
        %v553 = vunpack.c.l.b16 %v529
        %v554 = vunpack.c.l.b16 %v533
        %v555 = vunpack.c.l.b16 %v536
        %v556 = vunpack.c.l.b16 %v540
        %v557 = vunpack.c.l.b16 %v543
        %v558 = vpack.c.b16 %v547, %v546
        %v559 = vpack.c.b16 %v549, %v548
        %v560 = vpack.c.b16 %v551, %v550
        %v561 = vpack.c.b16 %v553, %v552
        %v562 = vpack.c.b16 %v555, %v554
        %v563 = vpack.c.b16 %v557, %v556
        %v565 = vsel %vm329, %v558, 0
        %v568 = vsel %vm329, %v559, 0
        %v571 = vsel %vm329, %v560, 0
        %v574 = vsel %vm329, %v561, 0
        %v577 = vsel %vm329, %v562, 0
        %v580 = vsel %vm329, %v563, 0
        %v583 = vsel %vm348, %v545, 0
        %585 = vmatpush.bf16.msra.mxu0 0
        %586 = vmatpush.bf16.msra.mxu0 0
        %587 = vmatpush.bf16.msra.mxu0 0
        %588 = vmatpush.bf16.msra.mxu0 0
        %589 = vmatpush.bf16.msra.mxu0 0
        %590 = vmatpush.bf16.msra.mxu0 0
        %591 = vmatpush.bf16.msra.mxu0 0
        %592 = vmatpush.bf16.msra.mxu0 %v583
        %593 = vmatmul.bf16.gmra.mxu0 %v565
        %v594 = vpop.f32.mrf.mxu0
        %v595 = vadd.f32 0.0, %v594
        %v596 = vpop.f32.mrf.mxu0
        %v597 = vadd.f32 0.0, %v596
        %598 = vmatmul.bf16.gmra.mxu0 %v568
        %v599 = vpop.f32.mrf.mxu0
        %v600 = vadd.f32 0.0, %v599
        %v601 = vpop.f32.mrf.mxu0
        %v602 = vadd.f32 0.0, %v601
        %603 = vmatmul.bf16.gmra.mxu0 %v571
        %v604 = vpop.f32.mrf.mxu0
        %v605 = vadd.f32 0.0, %v604
        %v606 = vpop.f32.mrf.mxu0
        %v607 = vadd.f32 0.0, %v606
        %608 = vmatmul.bf16.gmra.mxu0 %v574
        %v609 = vpop.f32.mrf.mxu0
        %v610 = vadd.f32 0.0, %v609
        %v611 = vpop.f32.mrf.mxu0
        %v612 = vadd.f32 0.0, %v611
        %613 = vmatmul.bf16.gmra.mxu0 %v577
        %v614 = vpop.f32.mrf.mxu0
        %v615 = vadd.f32 0.0, %v614
        %v616 = vpop.f32.mrf.mxu0
        %v617 = vadd.f32 0.0, %v616
        %618 = vmatmul.bf16.gmra.mxu0 %v580
        %v619 = vpop.f32.mrf.mxu0
        %v620 = vadd.f32 0.0, %v619
        %v621 = vpop.f32.mrf.mxu0
        %v622 = vadd.f32 0.0, %v621
        %623 = vdwg.mxu0
        %v624 = vadd.f32 %v452, %v595
        %v625 = vadd.f32 %v454, %v597
        %v626 = vadd.f32 %v457, %v600
        %v627 = vadd.f32 %v459, %v602
        %v628 = vadd.f32 %v462, %v605
        %v629 = vadd.f32 %v464, %v607
        %v630 = vadd.f32 %v467, %v610
        %v631 = vadd.f32 %v469, %v612
        %v632 = vadd.f32 %v472, %v615
        %v633 = vadd.f32 %v474, %v617
        %v634 = vadd.f32 %v477, %v620
        %v635 = vadd.f32 %v479, %v622
        %s636 = scalar_lea.vmem %s141, 12
        %v637 = vld [vmem:[%s636] sm:$0xf]
        %v638 = vld [vmem:[%s636 + $0x4] sm:$0xf]
        %v639 = vld [vmem:[%s636 + $0xc] sm:$0xf]
        %v640 = vld [vmem:[%s636 + $0x10] sm:$0xf]
        %v641 = vld [vmem:[%s636 + $0x18] sm:$0xf]
        %v642 = vld [vmem:[%s636 + $0x1c] sm:$0xf]
        %v643 = vld [vmem:[%s636 + $0x24] sm:$0xf]
        %v644 = vld [vmem:[%s636 + $0x28] sm:$0xf]
        %v645 = vld [vmem:[%s636 + $0x30] sm:$0xf]
        %v646 = vld [vmem:[%s636 + $0x34] sm:$0xf]
        %v647 = vld [vmem:[%s636 + $0x3c] sm:$0xf]
        %v648 = vld [vmem:[%s636 + $0x40] sm:$0xf]
        %s649 = scalar_lea.vmem %s1, 6
        %v650 = vld [vmem:[%s649] sm:$0x3]
        %v663 = vunpack.c.l.b16 %v637
        %v664 = vunpack.c.l.b16 %v638
        %v665 = vunpack.c.l.b16 %v639
        %v666 = vunpack.c.l.b16 %v640
        %v667 = vunpack.c.l.b16 %v641
        %v668 = vunpack.c.l.b16 %v642
        %v669 = vunpack.c.l.b16 %v643
        %v670 = vunpack.c.l.b16 %v644
        %v671 = vunpack.c.l.b16 %v645
        %v672 = vunpack.c.l.b16 %v646
        %v673 = vunpack.c.l.b16 %v647
        %v674 = vunpack.c.l.b16 %v648
        %v675 = vpack.c.b16 %v664, %v663
        %v676 = vpack.c.b16 %v666, %v665
        %v677 = vpack.c.b16 %v668, %v667
        %v678 = vpack.c.b16 %v670, %v669
        %v679 = vpack.c.b16 %v672, %v671
        %v680 = vpack.c.b16 %v674, %v673
        %v682 = vsel %vm329, %v675, 0
        %v685 = vsel %vm329, %v676, 0
        %v688 = vsel %vm329, %v677, 0
        %v691 = vsel %vm329, %v678, 0
        %v694 = vsel %vm329, %v679, 0
        %v697 = vsel %vm329, %v680, 0
        %v700 = vsel %vm348, %v650, 0
        %702 = vmatpush.bf16.msra.mxu0 0
        %703 = vmatpush.bf16.msra.mxu0 0
        %704 = vmatpush.bf16.msra.mxu0 0
        %705 = vmatpush.bf16.msra.mxu0 0
        %706 = vmatpush.bf16.msra.mxu0 0
        %707 = vmatpush.bf16.msra.mxu0 0
        %708 = vmatpush.bf16.msra.mxu0 0
        %709 = vmatpush.bf16.msra.mxu0 %v700
        %710 = vmatmul.bf16.gmra.mxu0 %v682
        %v711 = vpop.f32.mrf.mxu0
        %v712 = vadd.f32 0.0, %v711
        %v713 = vpop.f32.mrf.mxu0
        %v714 = vadd.f32 0.0, %v713
        %715 = vmatmul.bf16.gmra.mxu0 %v685
        %v716 = vpop.f32.mrf.mxu0
        %v717 = vadd.f32 0.0, %v716
        %v718 = vpop.f32.mrf.mxu0
        %v719 = vadd.f32 0.0, %v718
        %720 = vmatmul.bf16.gmra.mxu0 %v688
        %v721 = vpop.f32.mrf.mxu0
        %v722 = vadd.f32 0.0, %v721
        %v723 = vpop.f32.mrf.mxu0
        %v724 = vadd.f32 0.0, %v723
        %725 = vmatmul.bf16.gmra.mxu0 %v691
        %v726 = vpop.f32.mrf.mxu0
        %v727 = vadd.f32 0.0, %v726
        %v728 = vpop.f32.mrf.mxu0
        %v729 = vadd.f32 0.0, %v728
        %730 = vmatmul.bf16.gmra.mxu0 %v694
        %v731 = vpop.f32.mrf.mxu0
        %v732 = vadd.f32 0.0, %v731
        %v733 = vpop.f32.mrf.mxu0
        %v734 = vadd.f32 0.0, %v733
        %735 = vmatmul.bf16.gmra.mxu0 %v697
        %v736 = vpop.f32.mrf.mxu0
        %v737 = vadd.f32 0.0, %v736
        %v738 = vpop.f32.mrf.mxu0
        %v739 = vadd.f32 0.0, %v738
        %740 = vdwg.mxu0
        %v741 = vadd.f32 %v624, %v712
        %v742 = vadd.f32 %v625, %v714
        %v743 = vadd.f32 %v626, %v717
        %v744 = vadd.f32 %v627, %v719
        %v745 = vadd.f32 %v628, %v722
        %v746 = vadd.f32 %v629, %v724
        %v747 = vadd.f32 %v630, %v727
        %v748 = vadd.f32 %v631, %v729
        %v749 = vadd.f32 %v632, %v732
        %v750 = vadd.f32 %v633, %v734
        %v751 = vadd.f32 %v634, %v737
        %v752 = vadd.f32 %v635, %v739
        %v753 = vld [vmem:[%s636] sm:$0xf]
        %v754 = vld [vmem:[%s636 + $0x4] sm:$0xf]
        %v755 = vld [vmem:[%s636 + $0x8] sm:$0x1]
        %v756 = vld [vmem:[%s636 + $0xc] sm:$0xf]
        %v757 = vld [vmem:[%s636 + $0x10] sm:$0xf]
        %v758 = vld [vmem:[%s636 + $0x14] sm:$0x1]
        %v759 = vld [vmem:[%s636 + $0x18] sm:$0xf]
        %v760 = vld [vmem:[%s636 + $0x1c] sm:$0xf]
        %v761 = vld [vmem:[%s636 + $0x20] sm:$0x1]
        %v762 = vld [vmem:[%s636 + $0x24] sm:$0xf]
        %v763 = vld [vmem:[%s636 + $0x28] sm:$0xf]
        %v764 = vld [vmem:[%s636 + $0x2c] sm:$0x1]
        %v765 = vld [vmem:[%s636 + $0x30] sm:$0xf]
        %v766 = vld [vmem:[%s636 + $0x34] sm:$0xf]
        %v767 = vld [vmem:[%s636 + $0x38] sm:$0x1]
        %v768 = vld [vmem:[%s636 + $0x3c] sm:$0xf]
        %v769 = vld [vmem:[%s636 + $0x40] sm:$0xf]
        %v770 = vld [vmem:[%s636 + $0x44] sm:$0x1]
        %v772 = vshrl.u32 %v753, 16
        %v774 = vrot.slane %v772, 4
        %v775 = vshll.u32 %v753, 16
        %v777 = vrot.slane %v775, 5
        %v778 = vor.u32 %v774, %v777
        %v779 = vrot.slane %v778, 4
        %v781 = vshll.u32 %v754, 16
        %v783 = vrot.slane %v781, 5
        %v784 = vsel %vm164, %v779, %v783
        %v785 = vshrl.u32 %v754, 16
        %v787 = vrot.slane %v785, 4
        %v788 = vor.u32 %v787, %v783
        %v789 = vrot.slane %v788, 4
        %v791 = vshll.u32 %v755, 16
        %v793 = vrot.slane %v791, 5
        %v794 = vsel %vm164, %v789, %v793
        %v796 = vshrl.u32 %v756, 16
        %v798 = vrot.slane %v796, 4
        %v799 = vshll.u32 %v756, 16
        %v801 = vrot.slane %v799, 5
        %v802 = vor.u32 %v798, %v801
        %v803 = vrot.slane %v802, 4
        %v805 = vshll.u32 %v757, 16
        %v807 = vrot.slane %v805, 5
        %v808 = vsel %vm164, %v803, %v807
        %v809 = vshrl.u32 %v757, 16
        %v811 = vrot.slane %v809, 4
        %v812 = vor.u32 %v811, %v807
        %v813 = vrot.slane %v812, 4
        %v815 = vshll.u32 %v758, 16
        %v817 = vrot.slane %v815, 5
        %v818 = vsel %vm164, %v813, %v817
        %v820 = vshrl.u32 %v759, 16
        %v822 = vrot.slane %v820, 4
        %v823 = vshll.u32 %v759, 16
        %v825 = vrot.slane %v823, 5
        %v826 = vor.u32 %v822, %v825
        %v827 = vrot.slane %v826, 4
        %v829 = vshll.u32 %v760, 16
        %v831 = vrot.slane %v829, 5
        %v832 = vsel %vm164, %v827, %v831
        %v833 = vshrl.u32 %v760, 16
        %v835 = vrot.slane %v833, 4
        %v836 = vor.u32 %v835, %v831
        %v837 = vrot.slane %v836, 4
        %v839 = vshll.u32 %v761, 16
        %v841 = vrot.slane %v839, 5
        %v842 = vsel %vm164, %v837, %v841
        %v844 = vshrl.u32 %v762, 16
        %v846 = vrot.slane %v844, 4
        %v847 = vshll.u32 %v762, 16
        %v849 = vrot.slane %v847, 5
        %v850 = vor.u32 %v846, %v849
        %v851 = vrot.slane %v850, 4
        %v853 = vshll.u32 %v763, 16
        %v855 = vrot.slane %v853, 5
        %v856 = vsel %vm164, %v851, %v855
        %v857 = vshrl.u32 %v763, 16
        %v859 = vrot.slane %v857, 4
        %v860 = vor.u32 %v859, %v855
        %v861 = vrot.slane %v860, 4
        %v863 = vshll.u32 %v764, 16
        %v865 = vrot.slane %v863, 5
        %v866 = vsel %vm164, %v861, %v865
        %v868 = vshrl.u32 %v765, 16
        %v870 = vrot.slane %v868, 4
        %v871 = vshll.u32 %v765, 16
        %v873 = vrot.slane %v871, 5
        %v874 = vor.u32 %v870, %v873
        %v875 = vrot.slane %v874, 4
        %v877 = vshll.u32 %v766, 16
        %v879 = vrot.slane %v877, 5
        %v880 = vsel %vm164, %v875, %v879
        %v881 = vshrl.u32 %v766, 16
        %v883 = vrot.slane %v881, 4
        %v884 = vor.u32 %v883, %v879
        %v885 = vrot.slane %v884, 4
        %v887 = vshll.u32 %v767, 16
        %v889 = vrot.slane %v887, 5
        %v890 = vsel %vm164, %v885, %v889
        %v892 = vshrl.u32 %v768, 16
        %v894 = vrot.slane %v892, 4
        %v895 = vshll.u32 %v768, 16
        %v897 = vrot.slane %v895, 5
        %v898 = vor.u32 %v894, %v897
        %v899 = vrot.slane %v898, 4
        %v901 = vshll.u32 %v769, 16
        %v903 = vrot.slane %v901, 5
        %v904 = vsel %vm164, %v899, %v903
        %v905 = vshrl.u32 %v769, 16
        %v907 = vrot.slane %v905, 4
        %v908 = vor.u32 %v907, %v903
        %v909 = vrot.slane %v908, 4
        %v911 = vshll.u32 %v770, 16
        %v913 = vrot.slane %v911, 5
        %v914 = vsel %vm164, %v909, %v913
        %s915 = scalar_lea.vmem %s1, 8
        %v916 = vld [vmem:[%s915] sm:$0x3]
        %v917 = vunpack.c.l.b16 %v784
        %v918 = vunpack.c.l.b16 %v794
        %v919 = vunpack.c.l.b16 %v808
        %v920 = vunpack.c.l.b16 %v818
        %v921 = vunpack.c.l.b16 %v832
        %v922 = vunpack.c.l.b16 %v842
        %v923 = vunpack.c.l.b16 %v856
        %v924 = vunpack.c.l.b16 %v866
        %v925 = vunpack.c.l.b16 %v880
        %v926 = vunpack.c.l.b16 %v890
        %v927 = vunpack.c.l.b16 %v904
        %v928 = vunpack.c.l.b16 %v914
        %v929 = vpack.c.b16 %v918, %v917
        %v930 = vpack.c.b16 %v920, %v919
        %v931 = vpack.c.b16 %v922, %v921
        %v932 = vpack.c.b16 %v924, %v923
        %v933 = vpack.c.b16 %v926, %v925
        %v934 = vpack.c.b16 %v928, %v927
        %v936 = vsel %vm329, %v929, 0
        %v939 = vsel %vm329, %v930, 0
        %v942 = vsel %vm329, %v931, 0
        %v945 = vsel %vm329, %v932, 0
        %v948 = vsel %vm329, %v933, 0
        %v951 = vsel %vm329, %v934, 0
        %v954 = vsel %vm348, %v916, 0
        %956 = vmatpush.bf16.msra.mxu0 0
        %957 = vmatpush.bf16.msra.mxu0 0
        %958 = vmatpush.bf16.msra.mxu0 0
        %959 = vmatpush.bf16.msra.mxu0 0
        %960 = vmatpush.bf16.msra.mxu0 0
        %961 = vmatpush.bf16.msra.mxu0 0
        %962 = vmatpush.bf16.msra.mxu0 0
        %963 = vmatpush.bf16.msra.mxu0 %v954
        %964 = vmatmul.bf16.gmra.mxu0 %v936
        %v965 = vpop.f32.mrf.mxu0
        %v966 = vadd.f32 0.0, %v965
        %v967 = vpop.f32.mrf.mxu0
        %v968 = vadd.f32 0.0, %v967
        %969 = vmatmul.bf16.gmra.mxu0 %v939
        %v970 = vpop.f32.mrf.mxu0
        %v971 = vadd.f32 0.0, %v970
        %v972 = vpop.f32.mrf.mxu0
        %v973 = vadd.f32 0.0, %v972
        %974 = vmatmul.bf16.gmra.mxu0 %v942
        %v975 = vpop.f32.mrf.mxu0
        %v976 = vadd.f32 0.0, %v975
        %v977 = vpop.f32.mrf.mxu0
        %v978 = vadd.f32 0.0, %v977
        %979 = vmatmul.bf16.gmra.mxu0 %v945
        %v980 = vpop.f32.mrf.mxu0
        %v981 = vadd.f32 0.0, %v980
        %v982 = vpop.f32.mrf.mxu0
        %v983 = vadd.f32 0.0, %v982
        %984 = vmatmul.bf16.gmra.mxu0 %v948
        %v985 = vpop.f32.mrf.mxu0
        %v986 = vadd.f32 0.0, %v985
        %v987 = vpop.f32.mrf.mxu0
        %v988 = vadd.f32 0.0, %v987
        %989 = vmatmul.bf16.gmra.mxu0 %v951
        %v990 = vpop.f32.mrf.mxu0
        %v991 = vadd.f32 0.0, %v990
        %v992 = vpop.f32.mrf.mxu0
        %v993 = vadd.f32 0.0, %v992
        %994 = vdwg.mxu0
        %v995 = vadd.f32 %v741, %v966
        %v996 = vadd.f32 %v742, %v968
        %v997 = vadd.f32 %v743, %v971
        %v998 = vadd.f32 %v744, %v973
        %v999 = vadd.f32 %v745, %v976
        %v1000 = vadd.f32 %v746, %v978
        %v1001 = vadd.f32 %v747, %v981
        %v1002 = vadd.f32 %v748, %v983
        %v1003 = vadd.f32 %v749, %v986
        %v1004 = vadd.f32 %v750, %v988
        %v1005 = vadd.f32 %v751, %v991
        %v1006 = vadd.f32 %v752, %v993
        %v1007 = vld [vmem:[%s636] sm:$0xe]
        %v1008 = vld [vmem:[%s636 + $0xc] sm:$0xe]
        %v1009 = vld [vmem:[%s636 + $0x18] sm:$0xe]
        %v1010 = vld [vmem:[%s636 + $0x24] sm:$0xe]
        %v1011 = vld [vmem:[%s636 + $0x30] sm:$0xe]
        %v1012 = vld [vmem:[%s636 + $0x3c] sm:$0xe]
        %v1031 = vrot.slane %v1007, 5
        %v1032 = vrot.slane %v1031, 4
        %v1033 = vrot.slane %v754, 5
        %v1034 = vsel %vm501, %v1032, %v1033
        %v1035 = vrot.slane %v1033, 4
        %v1036 = vrot.slane %v755, 5
        %v1037 = vsel %vm501, %v1035, %v1036
        %v1038 = vrot.slane %v1008, 5
        %v1039 = vrot.slane %v1038, 4
        %v1040 = vrot.slane %v757, 5
        %v1041 = vsel %vm501, %v1039, %v1040
        %v1042 = vrot.slane %v1040, 4
        %v1043 = vrot.slane %v758, 5
        %v1044 = vsel %vm501, %v1042, %v1043
        %v1045 = vrot.slane %v1009, 5
        %v1046 = vrot.slane %v1045, 4
        %v1047 = vrot.slane %v760, 5
        %v1048 = vsel %vm501, %v1046, %v1047
        %v1049 = vrot.slane %v1047, 4
        %v1050 = vrot.slane %v761, 5
        %v1051 = vsel %vm501, %v1049, %v1050
        %v1052 = vrot.slane %v1010, 5
        %v1053 = vrot.slane %v1052, 4
        %v1054 = vrot.slane %v763, 5
        %v1055 = vsel %vm501, %v1053, %v1054
        %v1056 = vrot.slane %v1054, 4
        %v1057 = vrot.slane %v764, 5
        %v1058 = vsel %vm501, %v1056, %v1057
        %v1059 = vrot.slane %v1011, 5
        %v1060 = vrot.slane %v1059, 4
        %v1061 = vrot.slane %v766, 5
        %v1062 = vsel %vm501, %v1060, %v1061
        %v1063 = vrot.slane %v1061, 4
        %v1064 = vrot.slane %v767, 5
        %v1065 = vsel %vm501, %v1063, %v1064
        %v1066 = vrot.slane %v1012, 5
        %v1067 = vrot.slane %v1066, 4
        %v1068 = vrot.slane %v769, 5
        %v1069 = vsel %vm501, %v1067, %v1068
        %v1070 = vrot.slane %v1068, 4
        %v1071 = vrot.slane %v770, 5
        %v1072 = vsel %vm501, %v1070, %v1071
        %s1073 = scalar_lea.vmem %s1, 10
        %v1074 = vld [vmem:[%s1073] sm:$0x3]
        %v1075 = vunpack.c.l.b16 %v1034
        %v1076 = vunpack.c.l.b16 %v1037
        %v1077 = vunpack.c.l.b16 %v1041
        %v1078 = vunpack.c.l.b16 %v1044
        %v1079 = vunpack.c.l.b16 %v1048
        %v1080 = vunpack.c.l.b16 %v1051
        %v1081 = vunpack.c.l.b16 %v1055
        %v1082 = vunpack.c.l.b16 %v1058
        %v1083 = vunpack.c.l.b16 %v1062
        %v1084 = vunpack.c.l.b16 %v1065
        %v1085 = vunpack.c.l.b16 %v1069
        %v1086 = vunpack.c.l.b16 %v1072
        %v1087 = vpack.c.b16 %v1076, %v1075
        %v1088 = vpack.c.b16 %v1078, %v1077
        %v1089 = vpack.c.b16 %v1080, %v1079
        %v1090 = vpack.c.b16 %v1082, %v1081
        %v1091 = vpack.c.b16 %v1084, %v1083
        %v1092 = vpack.c.b16 %v1086, %v1085
        %v1094 = vsel %vm329, %v1087, 0
        %v1097 = vsel %vm329, %v1088, 0
        %v1100 = vsel %vm329, %v1089, 0
        %v1103 = vsel %vm329, %v1090, 0
        %v1106 = vsel %vm329, %v1091, 0
        %v1109 = vsel %vm329, %v1092, 0
        %v1112 = vsel %vm348, %v1074, 0
        %1114 = vmatpush.bf16.msra.mxu0 0
        %1115 = vmatpush.bf16.msra.mxu0 0
        %1116 = vmatpush.bf16.msra.mxu0 0
        %1117 = vmatpush.bf16.msra.mxu0 0
        %1118 = vmatpush.bf16.msra.mxu0 0
        %1119 = vmatpush.bf16.msra.mxu0 0
        %1120 = vmatpush.bf16.msra.mxu0 0
        %1121 = vmatpush.bf16.msra.mxu0 %v1112
        %1122 = vmatmul.bf16.gmra.mxu0 %v1094
        %v1123 = vpop.f32.mrf.mxu0
        %v1124 = vadd.f32 0.0, %v1123
        %v1125 = vpop.f32.mrf.mxu0
        %v1126 = vadd.f32 0.0, %v1125
        %1127 = vmatmul.bf16.gmra.mxu0 %v1097
        %v1128 = vpop.f32.mrf.mxu0
        %v1129 = vadd.f32 0.0, %v1128
        %v1130 = vpop.f32.mrf.mxu0
        %v1131 = vadd.f32 0.0, %v1130
        %1132 = vmatmul.bf16.gmra.mxu0 %v1100
        %v1133 = vpop.f32.mrf.mxu0
        %v1134 = vadd.f32 0.0, %v1133
        %v1135 = vpop.f32.mrf.mxu0
        %v1136 = vadd.f32 0.0, %v1135
        %1137 = vmatmul.bf16.gmra.mxu0 %v1103
        %v1138 = vpop.f32.mrf.mxu0
        %v1139 = vadd.f32 0.0, %v1138
        %v1140 = vpop.f32.mrf.mxu0
        %v1141 = vadd.f32 0.0, %v1140
        %1142 = vmatmul.bf16.gmra.mxu0 %v1106
        %v1143 = vpop.f32.mrf.mxu0
        %v1144 = vadd.f32 0.0, %v1143
        %v1145 = vpop.f32.mrf.mxu0
        %v1146 = vadd.f32 0.0, %v1145
        %1147 = vmatmul.bf16.gmra.mxu0 %v1109
        %v1148 = vpop.f32.mrf.mxu0
        %v1149 = vadd.f32 0.0, %v1148
        %v1150 = vpop.f32.mrf.mxu0
        %v1151 = vadd.f32 0.0, %v1150
        %1152 = vdwg.mxu0
        %v1153 = vadd.f32 %v995, %v1124
        %v1154 = vadd.f32 %v996, %v1126
        %v1155 = vadd.f32 %v997, %v1129
        %v1156 = vadd.f32 %v998, %v1131
        %v1157 = vadd.f32 %v999, %v1134
        %v1158 = vadd.f32 %v1000, %v1136
        %v1159 = vadd.f32 %v1001, %v1139
        %v1160 = vadd.f32 %v1002, %v1141
        %v1161 = vadd.f32 %v1003, %v1144
        %v1162 = vadd.f32 %v1004, %v1146
        %v1163 = vadd.f32 %v1005, %v1149
        %v1164 = vadd.f32 %v1006, %v1151
        %s1165 = scalar_lea.vmem %s141, 24
        %v1166 = vld [vmem:[%s1165] sm:$0xf]
        %v1167 = vld [vmem:[%s1165 + $0x4] sm:$0xf]
        %v1168 = vld [vmem:[%s1165 + $0xc] sm:$0xf]
        %v1169 = vld [vmem:[%s1165 + $0x10] sm:$0xf]
        %v1170 = vld [vmem:[%s1165 + $0x18] sm:$0xf]
        %v1171 = vld [vmem:[%s1165 + $0x1c] sm:$0xf]
        %v1172 = vld [vmem:[%s1165 + $0x24] sm:$0xf]
        %v1173 = vld [vmem:[%s1165 + $0x28] sm:$0xf]
        %v1174 = vld [vmem:[%s1165 + $0x30] sm:$0xf]
        %v1175 = vld [vmem:[%s1165 + $0x34] sm:$0xf]
        %v1176 = vld [vmem:[%s1165 + $0x3c] sm:$0xf]
        %v1177 = vld [vmem:[%s1165 + $0x40] sm:$0xf]
        %s1178 = scalar_lea.vmem %s1, 12
        %v1179 = vld [vmem:[%s1178] sm:$0x3]
        %v1192 = vunpack.c.l.b16 %v1166
        %v1193 = vunpack.c.l.b16 %v1167
        %v1194 = vunpack.c.l.b16 %v1168
        %v1195 = vunpack.c.l.b16 %v1169
        %v1196 = vunpack.c.l.b16 %v1170
        %v1197 = vunpack.c.l.b16 %v1171
        %v1198 = vunpack.c.l.b16 %v1172
        %v1199 = vunpack.c.l.b16 %v1173
        %v1200 = vunpack.c.l.b16 %v1174
        %v1201 = vunpack.c.l.b16 %v1175
        %v1202 = vunpack.c.l.b16 %v1176
        %v1203 = vunpack.c.l.b16 %v1177
        %v1204 = vpack.c.b16 %v1193, %v1192
        %v1205 = vpack.c.b16 %v1195, %v1194
        %v1206 = vpack.c.b16 %v1197, %v1196
        %v1207 = vpack.c.b16 %v1199, %v1198
        %v1208 = vpack.c.b16 %v1201, %v1200
        %v1209 = vpack.c.b16 %v1203, %v1202
        %v1211 = vsel %vm329, %v1204, 0
        %v1214 = vsel %vm329, %v1205, 0
        %v1217 = vsel %vm329, %v1206, 0
        %v1220 = vsel %vm329, %v1207, 0
        %v1223 = vsel %vm329, %v1208, 0
        %v1226 = vsel %vm329, %v1209, 0
        %v1229 = vsel %vm348, %v1179, 0
        %1231 = vmatpush.bf16.msra.mxu0 0
        %1232 = vmatpush.bf16.msra.mxu0 0
        %1233 = vmatpush.bf16.msra.mxu0 0
        %1234 = vmatpush.bf16.msra.mxu0 0
        %1235 = vmatpush.bf16.msra.mxu0 0
        %1236 = vmatpush.bf16.msra.mxu0 0
        %1237 = vmatpush.bf16.msra.mxu0 0
        %1238 = vmatpush.bf16.msra.mxu0 %v1229
        %1239 = vmatmul.bf16.gmra.mxu0 %v1211
        %v1240 = vpop.f32.mrf.mxu0
        %v1241 = vadd.f32 0.0, %v1240
        %v1242 = vpop.f32.mrf.mxu0
        %v1243 = vadd.f32 0.0, %v1242
        %1244 = vmatmul.bf16.gmra.mxu0 %v1214
        %v1245 = vpop.f32.mrf.mxu0
        %v1246 = vadd.f32 0.0, %v1245
        %v1247 = vpop.f32.mrf.mxu0
        %v1248 = vadd.f32 0.0, %v1247
        %1249 = vmatmul.bf16.gmra.mxu0 %v1217
        %v1250 = vpop.f32.mrf.mxu0
        %v1251 = vadd.f32 0.0, %v1250
        %v1252 = vpop.f32.mrf.mxu0
        %v1253 = vadd.f32 0.0, %v1252
        %1254 = vmatmul.bf16.gmra.mxu0 %v1220
        %v1255 = vpop.f32.mrf.mxu0
        %v1256 = vadd.f32 0.0, %v1255
        %v1257 = vpop.f32.mrf.mxu0
        %v1258 = vadd.f32 0.0, %v1257
        %1259 = vmatmul.bf16.gmra.mxu0 %v1223
        %v1260 = vpop.f32.mrf.mxu0
        %v1261 = vadd.f32 0.0, %v1260
        %v1262 = vpop.f32.mrf.mxu0
        %v1263 = vadd.f32 0.0, %v1262
        %1264 = vmatmul.bf16.gmra.mxu0 %v1226
        %v1265 = vpop.f32.mrf.mxu0
        %v1266 = vadd.f32 0.0, %v1265
        %v1267 = vpop.f32.mrf.mxu0
        %v1268 = vadd.f32 0.0, %v1267
        %1269 = vdwg.mxu0
        %v1270 = vadd.f32 %v1153, %v1241
        %v1271 = vadd.f32 %v1154, %v1243
        %v1272 = vadd.f32 %v1155, %v1246
        %v1273 = vadd.f32 %v1156, %v1248
        %v1274 = vadd.f32 %v1157, %v1251
        %v1275 = vadd.f32 %v1158, %v1253
        %v1276 = vadd.f32 %v1159, %v1256
        %v1277 = vadd.f32 %v1160, %v1258
        %v1278 = vadd.f32 %v1161, %v1261
        %v1279 = vadd.f32 %v1162, %v1263
        %v1280 = vadd.f32 %v1163, %v1266
        %v1281 = vadd.f32 %v1164, %v1268
        %v1282 = vld [vmem:[%s1165] sm:$0xf]
        %v1283 = vld [vmem:[%s1165 + $0x4] sm:$0xf]
        %v1284 = vld [vmem:[%s1165 + $0x8] sm:$0x1]
        %v1285 = vld [vmem:[%s1165 + $0xc] sm:$0xf]
        %v1286 = vld [vmem:[%s1165 + $0x10] sm:$0xf]
        %v1287 = vld [vmem:[%s1165 + $0x14] sm:$0x1]
        %v1288 = vld [vmem:[%s1165 + $0x18] sm:$0xf]
        %v1289 = vld [vmem:[%s1165 + $0x1c] sm:$0xf]
        %v1290 = vld [vmem:[%s1165 + $0x20] sm:$0x1]
        %v1291 = vld [vmem:[%s1165 + $0x24] sm:$0xf]
        %v1292 = vld [vmem:[%s1165 + $0x28] sm:$0xf]
        %v1293 = vld [vmem:[%s1165 + $0x2c] sm:$0x1]
        %v1294 = vld [vmem:[%s1165 + $0x30] sm:$0xf]
        %v1295 = vld [vmem:[%s1165 + $0x34] sm:$0xf]
        %v1296 = vld [vmem:[%s1165 + $0x38] sm:$0x1]
        %v1297 = vld [vmem:[%s1165 + $0x3c] sm:$0xf]
        %v1298 = vld [vmem:[%s1165 + $0x40] sm:$0xf]
        %v1299 = vld [vmem:[%s1165 + $0x44] sm:$0x1]
        %v1301 = vshrl.u32 %v1282, 16
        %v1303 = vrot.slane %v1301, 4
        %v1304 = vshll.u32 %v1282, 16
        %v1306 = vrot.slane %v1304, 5
        %v1307 = vor.u32 %v1303, %v1306
        %v1308 = vrot.slane %v1307, 4
        %v1310 = vshll.u32 %v1283, 16
        %v1312 = vrot.slane %v1310, 5
        %v1313 = vsel %vm164, %v1308, %v1312
        %v1314 = vshrl.u32 %v1283, 16
        %v1316 = vrot.slane %v1314, 4
        %v1317 = vor.u32 %v1316, %v1312
        %v1318 = vrot.slane %v1317, 4
        %v1320 = vshll.u32 %v1284, 16
        %v1322 = vrot.slane %v1320, 5
        %v1323 = vsel %vm164, %v1318, %v1322
        %v1325 = vshrl.u32 %v1285, 16
        %v1327 = vrot.slane %v1325, 4
        %v1328 = vshll.u32 %v1285, 16
        %v1330 = vrot.slane %v1328, 5
        %v1331 = vor.u32 %v1327, %v1330
        %v1332 = vrot.slane %v1331, 4
        %v1334 = vshll.u32 %v1286, 16
        %v1336 = vrot.slane %v1334, 5
        %v1337 = vsel %vm164, %v1332, %v1336
        %v1338 = vshrl.u32 %v1286, 16
        %v1340 = vrot.slane %v1338, 4
        %v1341 = vor.u32 %v1340, %v1336
        %v1342 = vrot.slane %v1341, 4
        %v1344 = vshll.u32 %v1287, 16
        %v1346 = vrot.slane %v1344, 5
        %v1347 = vsel %vm164, %v1342, %v1346
        %v1349 = vshrl.u32 %v1288, 16
        %v1351 = vrot.slane %v1349, 4
        %v1352 = vshll.u32 %v1288, 16
        %v1354 = vrot.slane %v1352, 5
        %v1355 = vor.u32 %v1351, %v1354
        %v1356 = vrot.slane %v1355, 4
        %v1358 = vshll.u32 %v1289, 16
        %v1360 = vrot.slane %v1358, 5
        %v1361 = vsel %vm164, %v1356, %v1360
        %v1362 = vshrl.u32 %v1289, 16
        %v1364 = vrot.slane %v1362, 4
        %v1365 = vor.u32 %v1364, %v1360
        %v1366 = vrot.slane %v1365, 4
        %v1368 = vshll.u32 %v1290, 16
        %v1370 = vrot.slane %v1368, 5
        %v1371 = vsel %vm164, %v1366, %v1370
        %v1373 = vshrl.u32 %v1291, 16
        %v1375 = vrot.slane %v1373, 4
        %v1376 = vshll.u32 %v1291, 16
        %v1378 = vrot.slane %v1376, 5
        %v1379 = vor.u32 %v1375, %v1378
        %v1380 = vrot.slane %v1379, 4
        %v1382 = vshll.u32 %v1292, 16
        %v1384 = vrot.slane %v1382, 5
        %v1385 = vsel %vm164, %v1380, %v1384
        %v1386 = vshrl.u32 %v1292, 16
        %v1388 = vrot.slane %v1386, 4
        %v1389 = vor.u32 %v1388, %v1384
        %v1390 = vrot.slane %v1389, 4
        %v1392 = vshll.u32 %v1293, 16
        %v1394 = vrot.slane %v1392, 5
        %v1395 = vsel %vm164, %v1390, %v1394
        %v1397 = vshrl.u32 %v1294, 16
        %v1399 = vrot.slane %v1397, 4
        %v1400 = vshll.u32 %v1294, 16
        %v1402 = vrot.slane %v1400, 5
        %v1403 = vor.u32 %v1399, %v1402
        %v1404 = vrot.slane %v1403, 4
        %v1406 = vshll.u32 %v1295, 16
        %v1408 = vrot.slane %v1406, 5
        %v1409 = vsel %vm164, %v1404, %v1408
        %v1410 = vshrl.u32 %v1295, 16
        %v1412 = vrot.slane %v1410, 4
        %v1413 = vor.u32 %v1412, %v1408
        %v1414 = vrot.slane %v1413, 4
        %v1416 = vshll.u32 %v1296, 16
        %v1418 = vrot.slane %v1416, 5
        %v1419 = vsel %vm164, %v1414, %v1418
        %v1421 = vshrl.u32 %v1297, 16
        %v1423 = vrot.slane %v1421, 4
        %v1424 = vshll.u32 %v1297, 16
        %v1426 = vrot.slane %v1424, 5
        %v1427 = vor.u32 %v1423, %v1426
        %v1428 = vrot.slane %v1427, 4
        %v1430 = vshll.u32 %v1298, 16
        %v1432 = vrot.slane %v1430, 5
        %v1433 = vsel %vm164, %v1428, %v1432
        %v1434 = vshrl.u32 %v1298, 16
        %v1436 = vrot.slane %v1434, 4
        %v1437 = vor.u32 %v1436, %v1432
        %v1438 = vrot.slane %v1437, 4
        %v1440 = vshll.u32 %v1299, 16
        %v1442 = vrot.slane %v1440, 5
        %v1443 = vsel %vm164, %v1438, %v1442
        %s1444 = scalar_lea.vmem %s1, 14
        %v1445 = vld [vmem:[%s1444] sm:$0x3]
        %v1446 = vunpack.c.l.b16 %v1313
        %v1447 = vunpack.c.l.b16 %v1323
        %v1448 = vunpack.c.l.b16 %v1337
        %v1449 = vunpack.c.l.b16 %v1347
        %v1450 = vunpack.c.l.b16 %v1361
        %v1451 = vunpack.c.l.b16 %v1371
        %v1452 = vunpack.c.l.b16 %v1385
        %v1453 = vunpack.c.l.b16 %v1395
        %v1454 = vunpack.c.l.b16 %v1409
        %v1455 = vunpack.c.l.b16 %v1419
        %v1456 = vunpack.c.l.b16 %v1433
        %v1457 = vunpack.c.l.b16 %v1443
        %v1458 = vpack.c.b16 %v1447, %v1446
        %v1459 = vpack.c.b16 %v1449, %v1448
        %v1460 = vpack.c.b16 %v1451, %v1450
        %v1461 = vpack.c.b16 %v1453, %v1452
        %v1462 = vpack.c.b16 %v1455, %v1454
        %v1463 = vpack.c.b16 %v1457, %v1456
        %v1465 = vsel %vm329, %v1458, 0
        %v1468 = vsel %vm329, %v1459, 0
        %v1471 = vsel %vm329, %v1460, 0
        %v1474 = vsel %vm329, %v1461, 0
        %v1477 = vsel %vm329, %v1462, 0
        %v1480 = vsel %vm329, %v1463, 0
        %v1483 = vsel %vm348, %v1445, 0
        %1485 = vmatpush.bf16.msra.mxu0 0
        %1486 = vmatpush.bf16.msra.mxu0 0
        %1487 = vmatpush.bf16.msra.mxu0 0
        %1488 = vmatpush.bf16.msra.mxu0 0
        %1489 = vmatpush.bf16.msra.mxu0 0
        %1490 = vmatpush.bf16.msra.mxu0 0
        %1491 = vmatpush.bf16.msra.mxu0 0
        %1492 = vmatpush.bf16.msra.mxu0 %v1483
        %1493 = vmatmul.bf16.gmra.mxu0 %v1465
        %v1494 = vpop.f32.mrf.mxu0
        %v1495 = vadd.f32 0.0, %v1494
        %v1496 = vpop.f32.mrf.mxu0
        %v1497 = vadd.f32 0.0, %v1496
        %1498 = vmatmul.bf16.gmra.mxu0 %v1468
        %v1499 = vpop.f32.mrf.mxu0
        %v1500 = vadd.f32 0.0, %v1499
        %v1501 = vpop.f32.mrf.mxu0
        %v1502 = vadd.f32 0.0, %v1501
        %1503 = vmatmul.bf16.gmra.mxu0 %v1471
        %v1504 = vpop.f32.mrf.mxu0
        %v1505 = vadd.f32 0.0, %v1504
        %v1506 = vpop.f32.mrf.mxu0
        %v1507 = vadd.f32 0.0, %v1506
        %1508 = vmatmul.bf16.gmra.mxu0 %v1474
        %v1509 = vpop.f32.mrf.mxu0
        %v1510 = vadd.f32 0.0, %v1509
        %v1511 = vpop.f32.mrf.mxu0
        %v1512 = vadd.f32 0.0, %v1511
        %1513 = vmatmul.bf16.gmra.mxu0 %v1477
        %v1514 = vpop.f32.mrf.mxu0
        %v1515 = vadd.f32 0.0, %v1514
        %v1516 = vpop.f32.mrf.mxu0
        %v1517 = vadd.f32 0.0, %v1516
        %1518 = vmatmul.bf16.gmra.mxu0 %v1480
        %v1519 = vpop.f32.mrf.mxu0
        %v1520 = vadd.f32 0.0, %v1519
        %v1521 = vpop.f32.mrf.mxu0
        %v1522 = vadd.f32 0.0, %v1521
        %1523 = vdwg.mxu0
        %v1524 = vadd.f32 %v1270, %v1495
        %v1525 = vadd.f32 %v1271, %v1497
        %v1526 = vadd.f32 %v1272, %v1500
        %v1527 = vadd.f32 %v1273, %v1502
        %v1528 = vadd.f32 %v1274, %v1505
        %v1529 = vadd.f32 %v1275, %v1507
        %v1530 = vadd.f32 %v1276, %v1510
        %v1531 = vadd.f32 %v1277, %v1512
        %v1532 = vadd.f32 %v1278, %v1515
        %v1533 = vadd.f32 %v1279, %v1517
        %v1534 = vadd.f32 %v1280, %v1520
        %v1535 = vadd.f32 %v1281, %v1522
        %v1536 = vld [vmem:[%s1165] sm:$0xe]
        %v1537 = vld [vmem:[%s1165 + $0xc] sm:$0xe]
        %v1538 = vld [vmem:[%s1165 + $0x18] sm:$0xe]
        %v1539 = vld [vmem:[%s1165 + $0x24] sm:$0xe]
        %v1540 = vld [vmem:[%s1165 + $0x30] sm:$0xe]
        %v1541 = vld [vmem:[%s1165 + $0x3c] sm:$0xe]
        %v1560 = vrot.slane %v1536, 5
        %v1561 = vrot.slane %v1560, 4
        %v1562 = vrot.slane %v1283, 5
        %v1563 = vsel %vm501, %v1561, %v1562
        %v1564 = vrot.slane %v1562, 4
        %v1565 = vrot.slane %v1284, 5
        %v1566 = vsel %vm501, %v1564, %v1565
        %v1567 = vrot.slane %v1537, 5
        %v1568 = vrot.slane %v1567, 4
        %v1569 = vrot.slane %v1286, 5
        %v1570 = vsel %vm501, %v1568, %v1569
        %v1571 = vrot.slane %v1569, 4
        %v1572 = vrot.slane %v1287, 5
        %v1573 = vsel %vm501, %v1571, %v1572
        %v1574 = vrot.slane %v1538, 5
        %v1575 = vrot.slane %v1574, 4
        %v1576 = vrot.slane %v1289, 5
        %v1577 = vsel %vm501, %v1575, %v1576
        %v1578 = vrot.slane %v1576, 4
        %v1579 = vrot.slane %v1290, 5
        %v1580 = vsel %vm501, %v1578, %v1579
        %v1581 = vrot.slane %v1539, 5
        %v1582 = vrot.slane %v1581, 4
        %v1583 = vrot.slane %v1292, 5
        %v1584 = vsel %vm501, %v1582, %v1583
        %v1585 = vrot.slane %v1583, 4
        %v1586 = vrot.slane %v1293, 5
        %v1587 = vsel %vm501, %v1585, %v1586
        %v1588 = vrot.slane %v1540, 5
        %v1589 = vrot.slane %v1588, 4
        %v1590 = vrot.slane %v1295, 5
        %v1591 = vsel %vm501, %v1589, %v1590
        %v1592 = vrot.slane %v1590, 4
        %v1593 = vrot.slane %v1296, 5
        %v1594 = vsel %vm501, %v1592, %v1593
        %v1595 = vrot.slane %v1541, 5
        %v1596 = vrot.slane %v1595, 4
        %v1597 = vrot.slane %v1298, 5
        %v1598 = vsel %vm501, %v1596, %v1597
        %v1599 = vrot.slane %v1597, 4
        %v1600 = vrot.slane %v1299, 5
        %v1601 = vsel %vm501, %v1599, %v1600
        %s1602 = scalar_lea.vmem %s1, 16
        %v1603 = vld [vmem:[%s1602] sm:$0x3]
        %v1604 = vunpack.c.l.b16 %v1563
        %v1605 = vunpack.c.l.b16 %v1566
        %v1606 = vunpack.c.l.b16 %v1570
        %v1607 = vunpack.c.l.b16 %v1573
        %v1608 = vunpack.c.l.b16 %v1577
        %v1609 = vunpack.c.l.b16 %v1580
        %v1610 = vunpack.c.l.b16 %v1584
        %v1611 = vunpack.c.l.b16 %v1587
        %v1612 = vunpack.c.l.b16 %v1591
        %v1613 = vunpack.c.l.b16 %v1594
        %v1614 = vunpack.c.l.b16 %v1598
        %v1615 = vunpack.c.l.b16 %v1601
        %v1616 = vpack.c.b16 %v1605, %v1604
        %v1617 = vpack.c.b16 %v1607, %v1606
        %v1618 = vpack.c.b16 %v1609, %v1608
        %v1619 = vpack.c.b16 %v1611, %v1610
        %v1620 = vpack.c.b16 %v1613, %v1612
        %v1621 = vpack.c.b16 %v1615, %v1614
        %v1623 = vsel %vm329, %v1616, 0
        %v1626 = vsel %vm329, %v1617, 0
        %v1629 = vsel %vm329, %v1618, 0
        %v1632 = vsel %vm329, %v1619, 0
        %v1635 = vsel %vm329, %v1620, 0
        %v1638 = vsel %vm329, %v1621, 0
        %v1641 = vsel %vm348, %v1603, 0
        %1643 = vmatpush.bf16.msra.mxu0 0
        %1644 = vmatpush.bf16.msra.mxu0 0
        %1645 = vmatpush.bf16.msra.mxu0 0
        %1646 = vmatpush.bf16.msra.mxu0 0
        %1647 = vmatpush.bf16.msra.mxu0 0
        %1648 = vmatpush.bf16.msra.mxu0 0
        %1649 = vmatpush.bf16.msra.mxu0 0
        %1650 = vmatpush.bf16.msra.mxu0 %v1641
        %1651 = vmatmul.bf16.gmra.mxu0 %v1623
        %v1652 = vpop.f32.mrf.mxu0
        %v1653 = vadd.f32 0.0, %v1652
        %v1654 = vpop.f32.mrf.mxu0
        %v1655 = vadd.f32 0.0, %v1654
        %1656 = vmatmul.bf16.gmra.mxu0 %v1626
        %v1657 = vpop.f32.mrf.mxu0
        %v1658 = vadd.f32 0.0, %v1657
        %v1659 = vpop.f32.mrf.mxu0
        %v1660 = vadd.f32 0.0, %v1659
        %1661 = vmatmul.bf16.gmra.mxu0 %v1629
        %v1662 = vpop.f32.mrf.mxu0
        %v1663 = vadd.f32 0.0, %v1662
        %v1664 = vpop.f32.mrf.mxu0
        %v1665 = vadd.f32 0.0, %v1664
        %1666 = vmatmul.bf16.gmra.mxu0 %v1632
        %v1667 = vpop.f32.mrf.mxu0
        %v1668 = vadd.f32 0.0, %v1667
        %v1669 = vpop.f32.mrf.mxu0
        %v1670 = vadd.f32 0.0, %v1669
        %1671 = vmatmul.bf16.gmra.mxu0 %v1635
        %v1672 = vpop.f32.mrf.mxu0
        %v1673 = vadd.f32 0.0, %v1672
        %v1674 = vpop.f32.mrf.mxu0
        %v1675 = vadd.f32 0.0, %v1674
        %1676 = vmatmul.bf16.gmra.mxu0 %v1638
        %v1677 = vpop.f32.mrf.mxu0
        %v1678 = vadd.f32 0.0, %v1677
        %v1679 = vpop.f32.mrf.mxu0
        %v1680 = vadd.f32 0.0, %v1679
        %1681 = vdwg.mxu0
        %v1682 = vadd.f32 %v1524, %v1653
        %v1683 = vadd.f32 %v1525, %v1655
        %v1684 = vadd.f32 %v1526, %v1658
        %v1685 = vadd.f32 %v1527, %v1660
        %v1686 = vadd.f32 %v1528, %v1663
        %v1687 = vadd.f32 %v1529, %v1665
        %v1688 = vadd.f32 %v1530, %v1668
        %v1689 = vadd.f32 %v1531, %v1670
        %v1690 = vadd.f32 %v1532, %v1673
        %v1691 = vadd.f32 %v1533, %v1675
        %v1692 = vadd.f32 %v1534, %v1678
        %v1693 = vadd.f32 %v1535, %v1680
        %p1694 = scmp.lt.s32.totalorder %s16, 0
        %s1695 = ssub.s32 0, %s16
        %s1696 = scalar_select %p1694, %s1695, %s16
        %s1697 = sdiv.u32.pop %s1696, 3
        %s1698 = srem.u32.pop %s1696, 3
        %s1699 = ssub.s32 0, %s1698
        %s1700 = scalar_select %p1694, %s1699, %s1698
        %p1701 = scmp.ne.s32.totalorder %s1700, 0
        %p1702 = scmp.lt.s32.totalorder %s1700, 0
        %p1703 = pnand %p1702, %p1701
        %p1704 = pneg %p1703
        %s1705 = sadd.s32 %s1700, 3
        %s1706 = scalar_select %p1704, %s1705, %s1700
        %s1707 = smul.u32 %s1706, 6
        %s1708 = ssub.s32 16, %s1707
        %p1709 = scmp.lt.s32.totalorder %s1708, 6
        %s1710 = scalar_select %p1709, %s1708, 6
        %s1711 = smul.u32 %s1710, 16
        %v1712 = vlaneseq
        %v1713 = vshrl.u32 %v1712, 7
        %v1714 = vadd.s32 %v1713, 8
        %v1715 = vadd.s32 %v1713, 16
        %v1716 = vadd.s32 %v1713, 24
        %v1717 = vadd.s32 %v1713, 32
        %v1718 = vadd.s32 %v1713, 40
        %v1719 = vadd.s32 %v1713, 48
        %v1720 = vadd.s32 %v1713, 56
        %v1721 = vadd.s32 %v1713, 64
        %v1722 = vadd.s32 %v1713, 72
        %v1723 = vadd.s32 %v1713, 80
        %v1724 = vadd.s32 %v1713, 88
        %v1725 = vstv %s1711
        %vm1726 = vcmp.lt.s32.totalorder %v1713, %v1725
        %vm1727 = vcmp.lt.s32.totalorder %v1714, %v1725
        %vm1728 = vcmp.lt.s32.totalorder %v1715, %v1725
        %vm1729 = vcmp.lt.s32.totalorder %v1716, %v1725
        %vm1730 = vcmp.lt.s32.totalorder %v1717, %v1725
        %vm1731 = vcmp.lt.s32.totalorder %v1718, %v1725
        %vm1732 = vcmp.lt.s32.totalorder %v1719, %v1725
        %vm1733 = vcmp.lt.s32.totalorder %v1720, %v1725
        %vm1734 = vcmp.lt.s32.totalorder %v1721, %v1725
        %vm1735 = vcmp.lt.s32.totalorder %v1722, %v1725
        %vm1736 = vcmp.lt.s32.totalorder %v1723, %v1725
        %vm1737 = vcmp.lt.s32.totalorder %v1724, %v1725
        %s1738 = scvt.s32.f32 %s1711
        %v1739 = vsel %vm1726, 1, 0
        %v1740 = vsel %vm1727, 1, 0
        %v1741 = vsel %vm1728, 1, 0
        %v1742 = vsel %vm1729, 1, 0
        %v1743 = vsel %vm1730, 1, 0
        %v1744 = vsel %vm1731, 1, 0
        %v1745 = vsel %vm1732, 1, 0
        %v1746 = vsel %vm1733, 1, 0
        %v1747 = vsel %vm1734, 1, 0
        %v1748 = vsel %vm1735, 1, 0
        %v1749 = vsel %vm1736, 1, 0
        %v1750 = vsel %vm1737, 1, 0
        %vm1751 = vcmp.eq.s32.totalorder %v1739, 1
        %vm1752 = vcmp.eq.s32.totalorder %v1740, 1
        %vm1753 = vcmp.eq.s32.totalorder %v1741, 1
        %vm1754 = vcmp.eq.s32.totalorder %v1742, 1
        %vm1755 = vcmp.eq.s32.totalorder %v1743, 1
        %vm1756 = vcmp.eq.s32.totalorder %v1744, 1
        %vm1757 = vcmp.eq.s32.totalorder %v1745, 1
        %vm1758 = vcmp.eq.s32.totalorder %v1746, 1
        %vm1759 = vcmp.eq.s32.totalorder %v1747, 1
        %vm1760 = vcmp.eq.s32.totalorder %v1748, 1
        %vm1761 = vcmp.eq.s32.totalorder %v1749, 1
        %vm1762 = vcmp.eq.s32.totalorder %v1750, 1
        %v1763 = vsel %vm1751, %v1682, 0.0
        %v1764 = vsel %vm1752, %v1683, 0.0
        %v1765 = vsel %vm1753, %v1684, 0.0
        %v1766 = vsel %vm1754, %v1685, 0.0
        %v1767 = vsel %vm1755, %v1686, 0.0
        %v1768 = vsel %vm1756, %v1687, 0.0
        %v1769 = vsel %vm1757, %v1688, 0.0
        %v1770 = vsel %vm1758, %v1689, 0.0
        %v1771 = vsel %vm1759, %v1690, 0.0
        %v1772 = vsel %vm1760, %v1691, 0.0
        %v1773 = vsel %vm1761, %v1692, 0.0
        %v1774 = vsel %vm1762, %v1693, 0.0
        %v1775 = vadd.f32 %v1763, %v1764
        %v1776 = vadd.f32 %v1775, %v1765
        %v1777 = vadd.f32 %v1776, %v1766
        %v1778 = vadd.f32 %v1777, %v1767
        %v1779 = vadd.f32 %v1778, %v1768
        %v1780 = vadd.f32 %v1779, %v1769
        %v1781 = vadd.f32 %v1780, %v1770
        %v1782 = vadd.f32 %v1781, %v1771
        %v1783 = vadd.f32 %v1782, %v1772
        %v1784 = vadd.f32 %v1783, %v1773
        %v1785 = vadd.f32 %v1784, %v1774
        %v1786 = vrot.slane %v1785, 4
        %v1787 = vadd.f32 %v1785, %v1786
        %v1788 = vrot.slane %v1787, 2
        %v1789 = vadd.f32 %v1787, %v1788
        %v1790 = vrot.slane %v1789, 1
        %v1791 = vadd.f32 %v1789, %v1790
        %v1792 = vstv %s1738
        %v1793 = vrcp.pop %v1792
        %v1794 = vmul.f32 %v1792, %v1793
        %v1795 = vsub.f32 1.0, %v1794
        %v1796 = vmul.f32 %v1793, %v1795
        %v1797 = vadd.f32 %v1793, %v1796
        %vm1798 = vweird.f32 %v1792
        %vm1799 = vweird.f32 %v1793
        %vm1800 = vmor %vm1798, %vm1799
        %v1801 = vsel %vm1800, %v1793, %v1797
        %v1802 = vand.u32 2147483647, %v1792
        %vm1803 = vcmp.eq.f32.partialorder %v1802, 8.507059e+37
        %v1804 = vand.u32 %v1792, 2147483648
        %v1805 = vor.u32 1.1754944e-38, %v1804
        %v1806 = vsel %vm1803, %v1805, %v1801
        %v1807 = vmul.f32 %v1791, %v1806
        %v1808 = vsub.f32 %v1682, %v1807
        %v1809 = vsub.f32 %v1683, %v1807
        %v1810 = vsub.f32 %v1684, %v1807
        %v1811 = vsub.f32 %v1685, %v1807
        %v1812 = vsub.f32 %v1686, %v1807
        %v1813 = vsub.f32 %v1687, %v1807
        %v1814 = vsub.f32 %v1688, %v1807
        %v1815 = vsub.f32 %v1689, %v1807
        %v1816 = vsub.f32 %v1690, %v1807
        %v1817 = vsub.f32 %v1691, %v1807
        %v1818 = vsub.f32 %v1692, %v1807
        %v1819 = vsub.f32 %v1693, %v1807
        %v1820 = vsel %vm1751, %v1808, 0.0
        %v1821 = vsel %vm1752, %v1809, 0.0
        %v1822 = vsel %vm1753, %v1810, 0.0
        %v1823 = vsel %vm1754, %v1811, 0.0
        %v1824 = vsel %vm1755, %v1812, 0.0
        %v1825 = vsel %vm1756, %v1813, 0.0
        %v1826 = vsel %vm1757, %v1814, 0.0
        %v1827 = vsel %vm1758, %v1815, 0.0
        %v1828 = vsel %vm1759, %v1816, 0.0
        %v1829 = vsel %vm1760, %v1817, 0.0
        %v1830 = vsel %vm1761, %v1818, 0.0
        %v1831 = vsel %vm1762, %v1819, 0.0
        %v1832 = vmul.f32 %v1820, %v1820
        %v1833 = vmul.f32 %v1821, %v1821
        %v1834 = vmul.f32 %v1822, %v1822
        %v1835 = vmul.f32 %v1823, %v1823
        %v1836 = vmul.f32 %v1824, %v1824
        %v1837 = vmul.f32 %v1825, %v1825
        %v1838 = vmul.f32 %v1826, %v1826
        %v1839 = vmul.f32 %v1827, %v1827
        %v1840 = vmul.f32 %v1828, %v1828
        %v1841 = vmul.f32 %v1829, %v1829
        %v1842 = vmul.f32 %v1830, %v1830
        %v1843 = vmul.f32 %v1831, %v1831
        %v1844 = vadd.f32 %v1832, %v1833
        %v1845 = vadd.f32 %v1844, %v1834
        %v1846 = vadd.f32 %v1845, %v1835
        %v1847 = vadd.f32 %v1846, %v1836
        %v1848 = vadd.f32 %v1847, %v1837
        %v1849 = vadd.f32 %v1848, %v1838
        %v1850 = vadd.f32 %v1849, %v1839
        %v1851 = vadd.f32 %v1850, %v1840
        %v1852 = vadd.f32 %v1851, %v1841
        %v1853 = vadd.f32 %v1852, %v1842
        %v1854 = vadd.f32 %v1853, %v1843
        %v1855 = vrot.slane %v1854, 4
        %v1856 = vadd.f32 %v1854, %v1855
        %v1857 = vrot.slane %v1856, 2
        %v1858 = vadd.f32 %v1856, %v1857
        %v1859 = vrot.slane %v1858, 1
        %v1860 = vadd.f32 %v1858, %v1859
        %1861 = vst [vmem:[%s136] sm:$0x1] %v1791
        %1862 = vst [vmem:[%s136 + $0x1] sm:$0x1] %v1860
        %s1863 = sand.u32 %s71, 1
        %s1864 = scalar_lea.sflag [#allocation3], %s1863
        %s1865 = sand.u32 %s71, 1
        %s1866 = smul.addr %s1865, 2
        %s1867 = scalar_lea.vmem [#allocation2], %s1866
        // Predicated region
        $region29: #{tpu_custom_call.1} parent=27 // pred_check
          %p1868 = pneg %p81
        $region30: #{tpu_custom_call.1} parent=27 // pred_check_branch
          %1870 = sbr.rel (%p1868) target = $region32
        $region31: #{tpu_custom_call.1} parent=27 // pred_region
          %1872 = vsyncadd %s1864, 0
          %s1873 = smul.addr %s16, 2
          %s1874 = scalar_lea.hbm %s2, %s1873
          %s1876 = sshll.u32 %s1867, 4
          %s1877 = int_to_ptr.vmem [resolvable:$true] %s1876
          %s1878 = sshll.u32 %s1874, 4
          %s1879 = int_to_ptr.hbm [resolvable:$true] %s1878
          %1881 = dma.vmem_to_hbm [thread:$0]  %s1877, 32, %s1879, %s1864
        $region32: #{tpu_custom_call.1} parent=27 // pred_fallthru
          _
      $region28: #{tpu_custom_call.1} parent=5 // pred_fallthru
        _
      %p1882 = scmp.le.s32.totalorder 2, %s11
      // Predicated region
      $region33: #{tpu_custom_call.1} parent=5 // pred_check
        %p1883 = pneg %p1882
      $region34: #{tpu_custom_call.1} parent=5 // pred_check_branch
        %1885 = sbr.rel (%p1883) target = $region36
      $region35: #{tpu_custom_call.1} parent=5 // pred_region
        %s1886 = ssub.s32 %s11, 2
        // Predicated region
        $region37: #{tpu_custom_call.1} parent=35 // pred_check
          %p1887 = pneg %p87
        $region38: #{tpu_custom_call.1} parent=35 // pred_check_branch
          %1889 = sbr.rel (%p1887) target = $region40
        $region39: #{tpu_custom_call.1} parent=35 // pred_region
          %s1890 = sand.u32 %s72, 1
          %s1891 = scalar_lea.sflag [#allocation3], %s1890
          %s1892 = sand.u32 %s72, 1
          %s1893 = smul.addr %s1892, 2
          %s1894 = scalar_lea.vmem [#allocation2], %s1893
          %1896 = dma.done %s1891, 32
        $region40: #{tpu_custom_call.1} parent=35 // pred_fallthru
          _
      $region36: #{tpu_custom_call.1} parent=5 // pred_fallthru
        _
    $region6: #{tpu_custom_call.1} parent=1 // loop_footer
      %s15 = sadd.s32 1, %s11
    $region7: #{tpu_custom_call.1} parent=1 // loop_footer_branch
      %10 = sbr.rel target = $region3
    $region8: #{tpu_custom_call.1} parent=1 // loop_exit
      _
    %1897 = vsyncpa [#allocation3], 1
    %s1898 = scalar_lea.sflag [#allocation3], 1
    %1899 = vsyncpa %s1898, 1

</llo_original>
